<compile_context>
chip_gen: v7x
topology: tpu7x:2x2x1
jax: 0.10.0
libtpu: 0.0.40
codegen_flags: <defaults>
</compile_context>

<pallas_src>
import jax
import jax.numpy as jnp
from jax import lax
from jax.experimental import pallas as pl
from jax.experimental.pallas import tpu as pltpu

# ----- small, BERT-like config (consistent with the module's forward) -----
B = 2          # batch of "sentences"
L = 8          # sequence length (stand-in for max_length=128)
D = 32         # hidden size
H = 2          # attention heads
DH = D // H    # head dim
FF = 4 * D     # intermediate (FFN) size
VOCAB = 100    # synthetic vocab
NLAYERS = 2    # transformer layers
EPS = 1e-12    # BERT LayerNorm eps


def _layernorm(x, g, b):
    mu = jnp.mean(x, axis=-1, keepdims=True)
    var = jnp.mean((x - mu) ** 2, axis=-1, keepdims=True)
    return (x - mu) * lax.rsqrt(var + EPS) * g + b


# ---------------------------------------------------------------------------
# Fused Pallas kernel: embedding add + LN + all encoder layers, one sentence
# per grid step (grid over batch, "parallel" for megacore/v7x).
# ---------------------------------------------------------------------------
def bert_kernel(tok_ref, pos_ref, typ_ref, eg_ref, eb_ref,
                wqkv_ref, bqkv_ref, wo_ref, bo_ref, g1_ref, be1_ref,
                w1_ref, c1_ref, w2_ref, c2_ref, g2_ref, be2_ref,
                o_ref):
    # Embedding sum (word + position + token-type) and LayerNorm, in f32.
    emb = tok_ref[...] + pos_ref[...] + typ_ref[...]                  # [L, D]
    x = _layernorm(emb, eg_ref[...], eb_ref[...])                     # [L, D] f32

    for li in range(NLAYERS):                                         # static unroll
        xb = x.astype(jnp.bfloat16)

        # Fused QKV projection: one bf16 MXU matmul per layer, f32 accumulation.
        # 1/sqrt(DH) is pre-folded into Wq (and bq, which is zero) in make_params.
        qkv = (jnp.dot(xb, wqkv_ref[li], preferred_element_type=jnp.float32)
               + bqkv_ref[li]).astype(jnp.bfloat16)                   # [L, 3D] bf16
        q, k, v = qkv[:, 0:D], qkv[:, D:2 * D], qkv[:, 2 * D:3 * D]

        # Head-major stacking: [H, L, DH] (leading-dim stack; no lane reshapes).
        qh = jnp.stack([q[:, h * DH:(h + 1) * DH] for h in range(H)], axis=0)
        kh = jnp.stack([k[:, h * DH:(h + 1) * DH] for h in range(H)], axis=0)
        vh = jnp.stack([v[:, h * DH:(h + 1) * DH] for h in range(H)], axis=0)

        # Scores for all heads in one batched matmul: [H, L, L].
        # TODO(synk): no attention mask -- the real module masks tokenizer padding.
        s = lax.dot_general(qh, kh, (((2,), (2,)), ((0,), (0,))),
                            preferred_element_type=jnp.float32)
        s = s - jnp.max(s, axis=-1, keepdims=True)
        p = jnp.exp(s)
        p = p / jnp.sum(p, axis=-1, keepdims=True)                    # exact softmax

        # Context for all heads: [H, L, DH] (bf16 operands, f32 accumulation).
        ctx = lax.dot_general(p.astype(jnp.bfloat16), vh,
                              (((2,), (1,)), ((0,), (0,))),
                              preferred_element_type=jnp.float32)

        # Output projection, heads batched: Wo stored as [H, DH, D];
        # sum_h ctx_h @ Wo_h  ==  concat_h(ctx_h) @ Wo  (no lane concat needed).
        attn_h = lax.dot_general(ctx.astype(jnp.bfloat16), wo_ref[li],
                                 (((2,), (1,)), ((0,), (0,))),
                                 preferred_element_type=jnp.float32)  # [H, L, D]
        attn_out = jnp.sum(attn_h, axis=0) + bo_ref[li]               # [L, D]

        h1 = _layernorm(x + attn_out, g1_ref[li], be1_ref[li])

        # FFN (bf16 MXU matmuls, f32 elementwise).
        ffn = (jnp.dot(h1.astype(jnp.bfloat16), w1_ref[li],
                       preferred_element_type=jnp.float32) + c1_ref[li])
        # TODO(synk): HF BERT uses exact erf-GELU; tanh-approximate GELU used here.
        ffn = jax.nn.gelu(ffn, approximate=True)
        ffn = (jnp.dot(ffn.astype(jnp.bfloat16), w2_ref[li],
                       preferred_element_type=jnp.float32) + c2_ref[li])

        x = _layernorm(h1 + ffn, g2_ref[li], be2_ref[li])

    o_ref[...] = x


# ---------------------------------------------------------------------------
# Deterministic parameter construction (synthetic, BERT-shaped)
# ---------------------------------------------------------------------------
def make_params(key):
    def nrm(k, shape, scale=0.02):
        return (scale * jax.random.normal(k, shape)).astype(jnp.float32)

    keys = jax.random.split(key, 4 + NLAYERS)
    p = {}
    p["word_emb"] = nrm(keys[0], (VOCAB, D))
    p["pos_emb"] = nrm(keys[1], (L, D))
    p["type_emb"] = nrm(keys[2], (2, D))
    p["emb_ln_g"] = jnp.ones((1, D), jnp.float32)
    p["emb_ln_b"] = jnp.zeros((1, D), jnp.float32)

    # 1/sqrt(DH) pre-folded into Wq (bq is zero; if it weren't, it must be
    # scaled too -- don't "fix" this later by scaling only the weight).
    scale = 1.0 / (DH ** 0.5)
    wqkv, wo, w1, w2 = [], [], [], []
    for li in range(NLAYERS):
        ks = jax.random.split(keys[4 + li], 6)
        wq = nrm(ks[0], (D, D)) * scale
        wk = nrm(ks[1], (D, D))
        wv = nrm(ks[2], (D, D))
        wqkv.append(jnp.concatenate([wq, wk, wv], axis=-1).astype(jnp.bfloat16))
        # Wo stored head-major [H, DH, D] so the kernel can batch over heads.
        wo.append(nrm(ks[3], (D, D)).reshape(H, DH, D).astype(jnp.bfloat16))
        w1.append(nrm(ks[4], (D, FF)).astype(jnp.bfloat16))
        w2.append(nrm(ks[5], (FF, D)).astype(jnp.bfloat16))

    zeros_d = jnp.zeros((NLAYERS, 1, D), jnp.float32)
    zeros_3d = jnp.zeros((NLAYERS, 1, 3 * D), jnp.float32)
    zeros_ff = jnp.zeros((NLAYERS, 1, FF), jnp.float32)
    ones_d = jnp.ones((NLAYERS, 1, D), jnp.float32)

    # Stacked per-layer params in the exact kernel argument order.
    p["stacked"] = [
        jnp.stack(wqkv), zeros_3d,   # fused Wqkv [NL,D,3D], bqkv [NL,1,3D]
        jnp.stack(wo), zeros_d,      # Wo [NL,H,DH,D], bo
        ones_d, zeros_d,             # LN1 gamma, beta
        jnp.stack(w1), zeros_ff,     # W1 [NL,D,FF], b1
        jnp.stack(w2), zeros_d,      # W2 [NL,FF,D], b2
        ones_d, zeros_d,             # LN2 gamma, beta
    ]
    return p


def _replicated_spec(arr):
    # Full-array block, same block for every grid step (weights stay resident).
    nd = arr.ndim
    return pl.BlockSpec(arr.shape, lambda b, _nd=nd: (0,) * _nd)


# ---------------------------------------------------------------------------
# Forward (equivalent of ClinicalBERTEncoder.forward on pre-tokenized ids)
# ---------------------------------------------------------------------------
def clinical_bert_encode(token_ids, params, output_cls=True):
    # TODO(synk): HF tokenization (raw text -> ids) and the word-embedding row
    # gather have no clean Pallas equivalent; the gather stays in JAX glue, the
    # pos/type add + embedding LayerNorm happen inside the kernel.
    tok = params["word_emb"][token_ids]                    # [B, L, D]
    typ = params["type_emb"][0:1]                          # [1, D] (token_type_ids=0)

    small_inputs = [params["pos_emb"], typ, params["emb_ln_g"], params["emb_ln_b"]]
    stacked = params["stacked"]

    in_specs = ([pl.BlockSpec((None, L, D), lambda b: (b, 0, 0))]      # tok: per-sentence
                + [_replicated_spec(a) for a in small_inputs]
                + [_replicated_spec(a) for a in stacked])

    hidden = pl.pallas_call(
        bert_kernel,
        out_shape=jax.ShapeDtypeStruct((B, L, D), jnp.float32),
        grid=(B,),
        in_specs=in_specs,
        out_specs=pl.BlockSpec((None, L, D), lambda b: (b, 0, 0)),
        compiler_params=pltpu.CompilerParams(
            dimension_semantics=("parallel",)),   # attention/LN only mix rows within a sentence
    )(tok, *small_inputs, *stacked)

    if output_cls:
        return hidden[:, 0, :]                             # [B, D]
    return hidden                                          # [B, L, D]


if __name__ == "__main__":
    key = jax.random.PRNGKey(0)
    k_ids, k_params = jax.random.split(key)

    # TODO(synk): real module tokenizes raw text with a HF tokenizer; synthetic ids here.
    token_ids = jax.random.randint(k_ids, (B, L), 0, VOCAB)
    params = make_params(k_params)

    cls_emb = clinical_bert_encode(token_ids, params, output_cls=True)
    cls_emb = jax.block_until_ready(cls_emb)
    assert cls_emb.shape == (B, D) and cls_emb.dtype == jnp.float32
    assert bool(jnp.all(jnp.isfinite(cls_emb)))
    print("KERNEL_OK")
</pallas_src>

<mosaic_0001>
module attributes {stable_mosaic.version = 11 : i64} {
  func.func @bert_kernel(%arg0: i32, %arg1: memref<1x8x32xf32, #tpu.memory_space<vmem>>, %arg2: memref<8x32xf32, #tpu.memory_space<vmem>>, %arg3: memref<1x32xf32, #tpu.memory_space<vmem>>, %arg4: memref<1x32xf32, #tpu.memory_space<vmem>>, %arg5: memref<1x32xf32, #tpu.memory_space<vmem>>, %arg6: memref<2x32x96xbf16, #tpu.memory_space<vmem>>, %arg7: memref<2x1x96xf32, #tpu.memory_space<vmem>>, %arg8: memref<2x2x16x32xbf16, #tpu.memory_space<vmem>>, %arg9: memref<2x1x32xf32, #tpu.memory_space<vmem>>, %arg10: memref<2x1x32xf32, #tpu.memory_space<vmem>>, %arg11: memref<2x1x32xf32, #tpu.memory_space<vmem>>, %arg12: memref<2x32x128xbf16, #tpu.memory_space<vmem>>, %arg13: memref<2x1x128xf32, #tpu.memory_space<vmem>>, %arg14: memref<2x128x32xbf16, #tpu.memory_space<vmem>>, %arg15: memref<2x1x32xf32, #tpu.memory_space<vmem>>, %arg16: memref<2x1x32xf32, #tpu.memory_space<vmem>>, %arg17: memref<2x1x32xf32, #tpu.memory_space<vmem>>, %arg18: memref<1x8x32xf32, #tpu.memory_space<vmem>>) attributes {dimension_semantics = [#tpu.dimension_semantics<parallel>], iteration_bounds = array<i64: 2>, scalar_prefetch = 0 : i64, scratch_operands = 0 : i64, tpu.core_type = #tpu.core_type<tc>, window_params = [{transform_indices = @transform_0, window_bounds = array<i64: 1, 8, 32>}, {pipeline_mode = #tpu.pipeline_mode<synchronous>, transform_indices = @transform_1, window_bounds = array<i64: 8, 32>}, {pipeline_mode = #tpu.pipeline_mode<synchronous>, transform_indices = @transform_2, window_bounds = array<i64: 1, 32>}, {pipeline_mode = #tpu.pipeline_mode<synchronous>, transform_indices = @transform_3, window_bounds = array<i64: 1, 32>}, {pipeline_mode = #tpu.pipeline_mode<synchronous>, transform_indices = @transform_4, window_bounds = array<i64: 1, 32>}, {pipeline_mode = #tpu.pipeline_mode<synchronous>, transform_indices = @transform_5, window_bounds = array<i64: 2, 32, 96>}, {pipeline_mode = #tpu.pipeline_mode<synchronous>, transform_indices = @transform_6, window_bounds = array<i64: 2, 1, 96>}, {pipeline_mode = #tpu.pipeline_mode<synchronous>, transform_indices = @transform_7, window_bounds = array<i64: 2, 2, 16, 32>}, {pipeline_mode = #tpu.pipeline_mode<synchronous>, transform_indices = @transform_8, window_bounds = array<i64: 2, 1, 32>}, {pipeline_mode = #tpu.pipeline_mode<synchronous>, transform_indices = @transform_9, window_bounds = array<i64: 2, 1, 32>}, {pipeline_mode = #tpu.pipeline_mode<synchronous>, transform_indices = @transform_10, window_bounds = array<i64: 2, 1, 32>}, {pipeline_mode = #tpu.pipeline_mode<synchronous>, transform_indices = @transform_11, window_bounds = array<i64: 2, 32, 128>}, {pipeline_mode = #tpu.pipeline_mode<synchronous>, transform_indices = @transform_12, window_bounds = array<i64: 2, 1, 128>}, {pipeline_mode = #tpu.pipeline_mode<synchronous>, transform_indices = @transform_13, window_bounds = array<i64: 2, 128, 32>}, {pipeline_mode = #tpu.pipeline_mode<synchronous>, transform_indices = @transform_14, window_bounds = array<i64: 2, 1, 32>}, {pipeline_mode = #tpu.pipeline_mode<synchronous>, transform_indices = @transform_15, window_bounds = array<i64: 2, 1, 32>}, {pipeline_mode = #tpu.pipeline_mode<synchronous>, transform_indices = @transform_16, window_bounds = array<i64: 2, 1, 32>}, {transform_indices = @transform_17, window_bounds = array<i64: 1, 8, 32>}]} {
    %c0 = arith.constant 0 : index
    %c0_0 = arith.constant 0 : index
    %c0_1 = arith.constant 0 : index
    %0 = vector.load %arg1[%c0, %c0_0, %c0_1] : memref<1x8x32xf32, #tpu.memory_space<vmem>>, vector<1x8x32xf32>
    %1 = vector.shape_cast %0 : vector<1x8x32xf32> to vector<8x32xf32>
    %c0_2 = arith.constant 0 : index
    %c0_3 = arith.constant 0 : index
    %2 = vector.load %arg2[%c0_2, %c0_3] : memref<8x32xf32, #tpu.memory_space<vmem>>, vector<8x32xf32>
    %3 = arith.addf %1, %2 : vector<8x32xf32>
    %c0_4 = arith.constant 0 : index
    %c0_5 = arith.constant 0 : index
    %4 = vector.load %arg3[%c0_4, %c0_5] : memref<1x32xf32, #tpu.memory_space<vmem>>, vector<1x32xf32>
    %5 = vector.broadcast %4 : vector<1x32xf32> to vector<8x32xf32>
    %6 = arith.addf %3, %5 : vector<8x32xf32>
    %c0_6 = arith.constant 0 : index
    %c0_7 = arith.constant 0 : index
    %7 = vector.load %arg4[%c0_6, %c0_7] : memref<1x32xf32, #tpu.memory_space<vmem>>, vector<1x32xf32>
    %c0_8 = arith.constant 0 : index
    %c0_9 = arith.constant 0 : index
    %8 = vector.load %arg5[%c0_8, %c0_9] : memref<1x32xf32, #tpu.memory_space<vmem>>, vector<1x32xf32>
    %cst = arith.constant dense<0.000000e+00> : vector<8xf32>
    %9 = vector.multi_reduction <add>, %6, %cst [1] : vector<8x32xf32> to vector<8xf32>
    %10 = vector.shape_cast %9 : vector<8xf32> to vector<8x1xf32>
    %cst_10 = arith.constant 3.200000e+01 : f32
    %11 = vector.broadcast %cst_10 : f32 to vector<8x1xf32>
    %12 = arith.divf %10, %11 : vector<8x1xf32>
    %13 = vector.broadcast %12 : vector<8x1xf32> to vector<8x32xf32>
    %14 = arith.subf %6, %13 : vector<8x32xf32>
    %15 = arith.mulf %14, %14 : vector<8x32xf32>
    %cst_11 = arith.constant dense<0.000000e+00> : vector<8xf32>
    %16 = vector.multi_reduction <add>, %15, %cst_11 [1] : vector<8x32xf32> to vector<8xf32>
    %17 = vector.shape_cast %16 : vector<8xf32> to vector<8x1xf32>
    %cst_12 = arith.constant 3.200000e+01 : f32
    %18 = vector.broadcast %cst_12 : f32 to vector<8x1xf32>
    %19 = arith.divf %17, %18 : vector<8x1xf32>
    %20 = vector.broadcast %12 : vector<8x1xf32> to vector<8x32xf32>
    %21 = arith.subf %6, %20 : vector<8x32xf32>
    %cst_13 = arith.constant 9.99999996E-13 : f32
    %22 = vector.broadcast %cst_13 : f32 to vector<8x1xf32>
    %23 = arith.addf %19, %22 : vector<8x1xf32>
    %24 = math.rsqrt %23 : vector<8x1xf32>
    %25 = vector.broadcast %24 : vector<8x1xf32> to vector<8x32xf32>
    %26 = arith.mulf %21, %25 : vector<8x32xf32>
    %27 = vector.broadcast %7 : vector<1x32xf32> to vector<8x32xf32>
    %28 = arith.mulf %26, %27 : vector<8x32xf32>
    %29 = vector.broadcast %8 : vector<1x32xf32> to vector<8x32xf32>
    %30 = arith.addf %28, %29 : vector<8x32xf32>
    %31 = arith.truncf %30 : vector<8x32xf32> to vector<8x32xbf16>
    %c0_14 = arith.constant 0 : index
    %c0_15 = arith.constant 0 : index
    %c0_16 = arith.constant 0 : index
    %32 = vector.load %arg6[%c0_14, %c0_15, %c0_16] : memref<2x32x96xbf16, #tpu.memory_space<vmem>>, vector<1x32x96xbf16>
    %33 = vector.shape_cast %32 : vector<1x32x96xbf16> to vector<32x96xbf16>
    %cst_17 = arith.constant dense<0.000000e+00> : vector<8x96xf32>
    %34 = tpu.matmul %31, %33, %cst_17 {dimension_numbers = #tpu.dot_dimension_numbers<[1], [0], [0], [1], [0, 0, 1, 1], [], []>} : vector<8x32xbf16>, vector<32x96xbf16>, vector<8x96xf32> -> vector<8x96xf32>
    %c0_18 = arith.constant 0 : index
    %c0_19 = arith.constant 0 : index
    %c0_20 = arith.constant 0 : index
    %35 = vector.load %arg7[%c0_18, %c0_19, %c0_20] : memref<2x1x96xf32, #tpu.memory_space<vmem>>, vector<1x1x96xf32>
    %36 = vector.shape_cast %35 : vector<1x1x96xf32> to vector<1x96xf32>
    %37 = vector.broadcast %36 : vector<1x96xf32> to vector<8x96xf32>
    %38 = arith.addf %34, %37 : vector<8x96xf32>
    %39 = arith.truncf %38 : vector<8x96xf32> to vector<8x96xbf16>
    %40 = vector.extract_strided_slice %39 {offsets = [0, 0], sizes = [8, 32], strides = [1, 1]} : vector<8x96xbf16> to vector<8x32xbf16>
    %41 = vector.extract_strided_slice %39 {offsets = [0, 32], sizes = [8, 32], strides = [1, 1]} : vector<8x96xbf16> to vector<8x32xbf16>
    %42 = vector.extract_strided_slice %39 {offsets = [0, 64], sizes = [8, 32], strides = [1, 1]} : vector<8x96xbf16> to vector<8x32xbf16>
    %43 = vector.extract_strided_slice %40 {offsets = [0, 0], sizes = [8, 16], strides = [1, 1]} : vector<8x32xbf16> to vector<8x16xbf16>
    %44 = vector.extract_strided_slice %40 {offsets = [0, 16], sizes = [8, 16], strides = [1, 1]} : vector<8x32xbf16> to vector<8x16xbf16>
    %45 = vector.shape_cast %43 : vector<8x16xbf16> to vector<1x8x16xbf16>
    %46 = vector.shape_cast %44 : vector<8x16xbf16> to vector<1x8x16xbf16>
    %47 = tpu.concatenate %45, %46 in 0 : vector<1x8x16xbf16>, vector<1x8x16xbf16> -> vector<2x8x16xbf16>
    %48 = vector.extract_strided_slice %41 {offsets = [0, 0], sizes = [8, 16], strides = [1, 1]} : vector<8x32xbf16> to vector<8x16xbf16>
    %49 = vector.extract_strided_slice %41 {offsets = [0, 16], sizes = [8, 16], strides = [1, 1]} : vector<8x32xbf16> to vector<8x16xbf16>
    %50 = vector.shape_cast %48 : vector<8x16xbf16> to vector<1x8x16xbf16>
    %51 = vector.shape_cast %49 : vector<8x16xbf16> to vector<1x8x16xbf16>
    %52 = tpu.concatenate %50, %51 in 0 : vector<1x8x16xbf16>, vector<1x8x16xbf16> -> vector<2x8x16xbf16>
    %53 = vector.extract_strided_slice %42 {offsets = [0, 0], sizes = [8, 16], strides = [1, 1]} : vector<8x32xbf16> to vector<8x16xbf16>
    %54 = vector.extract_strided_slice %42 {offsets = [0, 16], sizes = [8, 16], strides = [1, 1]} : vector<8x32xbf16> to vector<8x16xbf16>
    %55 = vector.shape_cast %53 : vector<8x16xbf16> to vector<1x8x16xbf16>
    %56 = vector.shape_cast %54 : vector<8x16xbf16> to vector<1x8x16xbf16>
    %57 = tpu.concatenate %55, %56 in 0 : vector<1x8x16xbf16>, vector<1x8x16xbf16> -> vector<2x8x16xbf16>
    %cst_21 = arith.constant dense<0.000000e+00> : vector<2x8x8xf32>
    %58 = tpu.matmul %47, %52, %cst_21 {dimension_numbers = #tpu.dot_dimension_numbers<[2], [2], [1], [1], [0, 0, 0, 1, 1, 1], [0], [0]>} : vector<2x8x16xbf16>, vector<2x8x16xbf16>, vector<2x8x8xf32> -> vector<2x8x8xf32>
    %cst_22 = arith.constant dense<0xFF800000> : vector<2x8xf32>
    %59 = vector.multi_reduction <maximumf>, %58, %cst_22 [2] : vector<2x8x8xf32> to vector<2x8xf32>
    %60 = vector.shape_cast %59 : vector<2x8xf32> to vector<2x8x1xf32>
    %61 = vector.broadcast %60 : vector<2x8x1xf32> to vector<2x8x8xf32>
    %62 = arith.subf %58, %61 : vector<2x8x8xf32>
    %63 = math.exp %62 : vector<2x8x8xf32>
    %cst_23 = arith.constant dense<0.000000e+00> : vector<2x8xf32>
    %64 = vector.multi_reduction <add>, %63, %cst_23 [2] : vector<2x8x8xf32> to vector<2x8xf32>
    %65 = vector.shape_cast %64 : vector<2x8xf32> to vector<2x8x1xf32>
    %66 = vector.broadcast %65 : vector<2x8x1xf32> to vector<2x8x8xf32>
    %67 = arith.divf %63, %66 : vector<2x8x8xf32>
    %68 = arith.truncf %67 : vector<2x8x8xf32> to vector<2x8x8xbf16>
    %cst_24 = arith.constant dense<0.000000e+00> : vector<2x8x16xf32>
    %69 = tpu.matmul %68, %57, %cst_24 {dimension_numbers = #tpu.dot_dimension_numbers<[2], [1], [1], [2], [0, 0, 0, 1, 1, 2], [0], [0]>} : vector<2x8x8xbf16>, vector<2x8x16xbf16>, vector<2x8x16xf32> -> vector<2x8x16xf32>
    %70 = arith.truncf %69 : vector<2x8x16xf32> to vector<2x8x16xbf16>
    %c0_25 = arith.constant 0 : index
    %c0_26 = arith.constant 0 : index
    %c0_27 = arith.constant 0 : index
    %c0_28 = arith.constant 0 : index
    %71 = vector.load %arg8[%c0_25, %c0_26, %c0_27, %c0_28] : memref<2x2x16x32xbf16, #tpu.memory_space<vmem>>, vector<1x2x16x32xbf16>
    %72 = vector.shape_cast %71 : vector<1x2x16x32xbf16> to vector<2x16x32xbf16>
    %cst_29 = arith.constant dense<0.000000e+00> : vector<2x8x32xf32>
    %73 = tpu.matmul %70, %72, %cst_29 {dimension_numbers = #tpu.dot_dimension_numbers<[2], [1], [1], [2], [0, 0, 0, 1, 1, 2], [0], [0]>} : vector<2x8x16xbf16>, vector<2x16x32xbf16>, vector<2x8x32xf32> -> vector<2x8x32xf32>
    %cst_30 = arith.constant dense<0.000000e+00> : vector<8x32xf32>
    %74 = vector.multi_reduction <add>, %73, %cst_30 [0] : vector<2x8x32xf32> to vector<8x32xf32>
    %c0_31 = arith.constant 0 : index
    %c0_32 = arith.constant 0 : index
    %c0_33 = arith.constant 0 : index
    %75 = vector.load %arg9[%c0_31, %c0_32, %c0_33] : memref<2x1x32xf32, #tpu.memory_space<vmem>>, vector<1x1x32xf32>
    %76 = vector.shape_cast %75 : vector<1x1x32xf32> to vector<1x32xf32>
    %77 = vector.broadcast %76 : vector<1x32xf32> to vector<8x32xf32>
    %78 = arith.addf %74, %77 : vector<8x32xf32>
    %79 = arith.addf %30, %78 : vector<8x32xf32>
    %c0_34 = arith.constant 0 : index
    %c0_35 = arith.constant 0 : index
    %c0_36 = arith.constant 0 : index
    %80 = vector.load %arg10[%c0_34, %c0_35, %c0_36] : memref<2x1x32xf32, #tpu.memory_space<vmem>>, vector<1x1x32xf32>
    %81 = vector.shape_cast %80 : vector<1x1x32xf32> to vector<1x32xf32>
    %c0_37 = arith.constant 0 : index
    %c0_38 = arith.constant 0 : index
    %c0_39 = arith.constant 0 : index
    %82 = vector.load %arg11[%c0_37, %c0_38, %c0_39] : memref<2x1x32xf32, #tpu.memory_space<vmem>>, vector<1x1x32xf32>
    %83 = vector.shape_cast %82 : vector<1x1x32xf32> to vector<1x32xf32>
    %cst_40 = arith.constant dense<0.000000e+00> : vector<8xf32>
    %84 = vector.multi_reduction <add>, %79, %cst_40 [1] : vector<8x32xf32> to vector<8xf32>
    %85 = vector.shape_cast %84 : vector<8xf32> to vector<8x1xf32>
    %cst_41 = arith.constant 3.200000e+01 : f32
    %86 = vector.broadcast %cst_41 : f32 to vector<8x1xf32>
    %87 = arith.divf %85, %86 : vector<8x1xf32>
    %88 = vector.broadcast %87 : vector<8x1xf32> to vector<8x32xf32>
    %89 = arith.subf %79, %88 : vector<8x32xf32>
    %90 = arith.mulf %89, %89 : vector<8x32xf32>
    %cst_42 = arith.constant dense<0.000000e+00> : vector<8xf32>
    %91 = vector.multi_reduction <add>, %90, %cst_42 [1] : vector<8x32xf32> to vector<8xf32>
    %92 = vector.shape_cast %91 : vector<8xf32> to vector<8x1xf32>
    %cst_43 = arith.constant 3.200000e+01 : f32
    %93 = vector.broadcast %cst_43 : f32 to vector<8x1xf32>
    %94 = arith.divf %92, %93 : vector<8x1xf32>
    %95 = vector.broadcast %87 : vector<8x1xf32> to vector<8x32xf32>
    %96 = arith.subf %79, %95 : vector<8x32xf32>
    %cst_44 = arith.constant 9.99999996E-13 : f32
    %97 = vector.broadcast %cst_44 : f32 to vector<8x1xf32>
    %98 = arith.addf %94, %97 : vector<8x1xf32>
    %99 = math.rsqrt %98 : vector<8x1xf32>
    %100 = vector.broadcast %99 : vector<8x1xf32> to vector<8x32xf32>
    %101 = arith.mulf %96, %100 : vector<8x32xf32>
    %102 = vector.broadcast %81 : vector<1x32xf32> to vector<8x32xf32>
    %103 = arith.mulf %101, %102 : vector<8x32xf32>
    %104 = vector.broadcast %83 : vector<1x32xf32> to vector<8x32xf32>
    %105 = arith.addf %103, %104 : vector<8x32xf32>
    %106 = arith.truncf %105 : vector<8x32xf32> to vector<8x32xbf16>
    %c0_45 = arith.constant 0 : index
    %c0_46 = arith.constant 0 : index
    %c0_47 = arith.constant 0 : index
    %107 = vector.load %arg12[%c0_45, %c0_46, %c0_47] : memref<2x32x128xbf16, #tpu.memory_space<vmem>>, vector<1x32x128xbf16>
    %108 = vector.shape_cast %107 : vector<1x32x128xbf16> to vector<32x128xbf16>
    %cst_48 = arith.constant dense<0.000000e+00> : vector<8x128xf32>
    %109 = tpu.matmul %106, %108, %cst_48 {dimension_numbers = #tpu.dot_dimension_numbers<[1], [0], [0], [1], [0, 0, 1, 1], [], []>} : vector<8x32xbf16>, vector<32x128xbf16>, vector<8x128xf32> -> vector<8x128xf32>
    %c0_49 = arith.constant 0 : index
    %c0_50 = arith.constant 0 : index
    %c0_51 = arith.constant 0 : index
    %110 = vector.load %arg13[%c0_49, %c0_50, %c0_51] : memref<2x1x128xf32, #tpu.memory_space<vmem>>, vector<1x1x128xf32>
    %111 = vector.shape_cast %110 : vector<1x1x128xf32> to vector<1x128xf32>
    %112 = vector.broadcast %111 : vector<1x128xf32> to vector<8x128xf32>
    %113 = arith.addf %109, %112 : vector<8x128xf32>
    %114 = arith.mulf %113, %113 : vector<8x128xf32>
    %115 = arith.mulf %113, %114 : vector<8x128xf32>
    %cst_52 = arith.constant 4.471500e-02 : f32
    %116 = vector.broadcast %cst_52 : f32 to vector<8x128xf32>
    %117 = arith.mulf %116, %115 : vector<8x128xf32>
    %118 = arith.addf %113, %117 : vector<8x128xf32>
    %cst_53 = arith.constant 0.797884583 : f32
    %119 = vector.broadcast %cst_53 : f32 to vector<8x128xf32>
    %120 = arith.mulf %119, %118 : vector<8x128xf32>
    %121 = math.tanh %120 : vector<8x128xf32>
    %cst_54 = arith.constant 1.000000e+00 : f32
    %122 = vector.broadcast %cst_54 : f32 to vector<8x128xf32>
    %123 = arith.addf %122, %121 : vector<8x128xf32>
    %cst_55 = arith.constant 5.000000e-01 : f32
    %124 = vector.broadcast %cst_55 : f32 to vector<8x128xf32>
    %125 = arith.mulf %124, %123 : vector<8x128xf32>
    %126 = arith.mulf %113, %125 : vector<8x128xf32>
    %127 = arith.truncf %126 : vector<8x128xf32> to vector<8x128xbf16>
    %c0_56 = arith.constant 0 : index
    %c0_57 = arith.constant 0 : index
    %c0_58 = arith.constant 0 : index
    %128 = vector.load %arg14[%c0_56, %c0_57, %c0_58] : memref<2x128x32xbf16, #tpu.memory_space<vmem>>, vector<1x128x32xbf16>
    %129 = vector.shape_cast %128 : vector<1x128x32xbf16> to vector<128x32xbf16>
    %cst_59 = arith.constant dense<0.000000e+00> : vector<8x32xf32>
    %130 = tpu.matmul %127, %129, %cst_59 {dimension_numbers = #tpu.dot_dimension_numbers<[1], [0], [0], [1], [0, 0, 1, 1], [], []>} : vector<8x128xbf16>, vector<128x32xbf16>, vector<8x32xf32> -> vector<8x32xf32>
    %c0_60 = arith.constant 0 : index
    %c0_61 = arith.constant 0 : index
    %c0_62 = arith.constant 0 : index
    %131 = vector.load %arg15[%c0_60, %c0_61, %c0_62] : memref<2x1x32xf32, #tpu.memory_space<vmem>>, vector<1x1x32xf32>
    %132 = vector.shape_cast %131 : vector<1x1x32xf32> to vector<1x32xf32>
    %133 = vector.broadcast %132 : vector<1x32xf32> to vector<8x32xf32>
    %134 = arith.addf %130, %133 : vector<8x32xf32>
    %135 = arith.addf %105, %134 : vector<8x32xf32>
    %c0_63 = arith.constant 0 : index
    %c0_64 = arith.constant 0 : index
    %c0_65 = arith.constant 0 : index
    %136 = vector.load %arg16[%c0_63, %c0_64, %c0_65] : memref<2x1x32xf32, #tpu.memory_space<vmem>>, vector<1x1x32xf32>
    %137 = vector.shape_cast %136 : vector<1x1x32xf32> to vector<1x32xf32>
    %c0_66 = arith.constant 0 : index
    %c0_67 = arith.constant 0 : index
    %c0_68 = arith.constant 0 : index
    %138 = vector.load %arg17[%c0_66, %c0_67, %c0_68] : memref<2x1x32xf32, #tpu.memory_space<vmem>>, vector<1x1x32xf32>
    %139 = vector.shape_cast %138 : vector<1x1x32xf32> to vector<1x32xf32>
    %cst_69 = arith.constant dense<0.000000e+00> : vector<8xf32>
    %140 = vector.multi_reduction <add>, %135, %cst_69 [1] : vector<8x32xf32> to vector<8xf32>
    %141 = vector.shape_cast %140 : vector<8xf32> to vector<8x1xf32>
    %cst_70 = arith.constant 3.200000e+01 : f32
    %142 = vector.broadcast %cst_70 : f32 to vector<8x1xf32>
    %143 = arith.divf %141, %142 : vector<8x1xf32>
    %144 = vector.broadcast %143 : vector<8x1xf32> to vector<8x32xf32>
    %145 = arith.subf %135, %144 : vector<8x32xf32>
    %146 = arith.mulf %145, %145 : vector<8x32xf32>
    %cst_71 = arith.constant dense<0.000000e+00> : vector<8xf32>
    %147 = vector.multi_reduction <add>, %146, %cst_71 [1] : vector<8x32xf32> to vector<8xf32>
    %148 = vector.shape_cast %147 : vector<8xf32> to vector<8x1xf32>
    %cst_72 = arith.constant 3.200000e+01 : f32
    %149 = vector.broadcast %cst_72 : f32 to vector<8x1xf32>
    %150 = arith.divf %148, %149 : vector<8x1xf32>
    %151 = vector.broadcast %143 : vector<8x1xf32> to vector<8x32xf32>
    %152 = arith.subf %135, %151 : vector<8x32xf32>
    %cst_73 = arith.constant 9.99999996E-13 : f32
    %153 = vector.broadcast %cst_73 : f32 to vector<8x1xf32>
    %154 = arith.addf %150, %153 : vector<8x1xf32>
    %155 = math.rsqrt %154 : vector<8x1xf32>
    %156 = vector.broadcast %155 : vector<8x1xf32> to vector<8x32xf32>
    %157 = arith.mulf %152, %156 : vector<8x32xf32>
    %158 = vector.broadcast %137 : vector<1x32xf32> to vector<8x32xf32>
    %159 = arith.mulf %157, %158 : vector<8x32xf32>
    %160 = vector.broadcast %139 : vector<1x32xf32> to vector<8x32xf32>
    %161 = arith.addf %159, %160 : vector<8x32xf32>
    %162 = arith.truncf %161 : vector<8x32xf32> to vector<8x32xbf16>
    %c1 = arith.constant 1 : index
    %c0_74 = arith.constant 0 : index
    %c0_75 = arith.constant 0 : index
    %163 = vector.load %arg6[%c1, %c0_74, %c0_75] : memref<2x32x96xbf16, #tpu.memory_space<vmem>>, vector<1x32x96xbf16>
    %164 = vector.shape_cast %163 : vector<1x32x96xbf16> to vector<32x96xbf16>
    %cst_76 = arith.constant dense<0.000000e+00> : vector<8x96xf32>
    %165 = tpu.matmul %162, %164, %cst_76 {dimension_numbers = #tpu.dot_dimension_numbers<[1], [0], [0], [1], [0, 0, 1, 1], [], []>} : vector<8x32xbf16>, vector<32x96xbf16>, vector<8x96xf32> -> vector<8x96xf32>
    %c1_77 = arith.constant 1 : index
    %c0_78 = arith.constant 0 : index
    %c0_79 = arith.constant 0 : index
    %166 = vector.load %arg7[%c1_77, %c0_78, %c0_79] : memref<2x1x96xf32, #tpu.memory_space<vmem>>, vector<1x1x96xf32>
    %167 = vector.shape_cast %166 : vector<1x1x96xf32> to vector<1x96xf32>
    %168 = vector.broadcast %167 : vector<1x96xf32> to vector<8x96xf32>
    %169 = arith.addf %165, %168 : vector<8x96xf32>
    %170 = arith.truncf %169 : vector<8x96xf32> to vector<8x96xbf16>
    %171 = vector.extract_strided_slice %170 {offsets = [0, 0], sizes = [8, 32], strides = [1, 1]} : vector<8x96xbf16> to vector<8x32xbf16>
    %172 = vector.extract_strided_slice %170 {offsets = [0, 32], sizes = [8, 32], strides = [1, 1]} : vector<8x96xbf16> to vector<8x32xbf16>
    %173 = vector.extract_strided_slice %170 {offsets = [0, 64], sizes = [8, 32], strides = [1, 1]} : vector<8x96xbf16> to vector<8x32xbf16>
    %174 = vector.extract_strided_slice %171 {offsets = [0, 0], sizes = [8, 16], strides = [1, 1]} : vector<8x32xbf16> to vector<8x16xbf16>
    %175 = vector.extract_strided_slice %171 {offsets = [0, 16], sizes = [8, 16], strides = [1, 1]} : vector<8x32xbf16> to vector<8x16xbf16>
    %176 = vector.shape_cast %174 : vector<8x16xbf16> to vector<1x8x16xbf16>
    %177 = vector.shape_cast %175 : vector<8x16xbf16> to vector<1x8x16xbf16>
    %178 = tpu.concatenate %176, %177 in 0 : vector<1x8x16xbf16>, vector<1x8x16xbf16> -> vector<2x8x16xbf16>
    %179 = vector.extract_strided_slice %172 {offsets = [0, 0], sizes = [8, 16], strides = [1, 1]} : vector<8x32xbf16> to vector<8x16xbf16>
    %180 = vector.extract_strided_slice %172 {offsets = [0, 16], sizes = [8, 16], strides = [1, 1]} : vector<8x32xbf16> to vector<8x16xbf16>
    %181 = vector.shape_cast %179 : vector<8x16xbf16> to vector<1x8x16xbf16>
    %182 = vector.shape_cast %180 : vector<8x16xbf16> to vector<1x8x16xbf16>
    %183 = tpu.concatenate %181, %182 in 0 : vector<1x8x16xbf16>, vector<1x8x16xbf16> -> vector<2x8x16xbf16>
    %184 = vector.extract_strided_slice %173 {offsets = [0, 0], sizes = [8, 16], strides = [1, 1]} : vector<8x32xbf16> to vector<8x16xbf16>
    %185 = vector.extract_strided_slice %173 {offsets = [0, 16], sizes = [8, 16], strides = [1, 1]} : vector<8x32xbf16> to vector<8x16xbf16>
    %186 = vector.shape_cast %184 : vector<8x16xbf16> to vector<1x8x16xbf16>
    %187 = vector.shape_cast %185 : vector<8x16xbf16> to vector<1x8x16xbf16>
    %188 = tpu.concatenate %186, %187 in 0 : vector<1x8x16xbf16>, vector<1x8x16xbf16> -> vector<2x8x16xbf16>
    %cst_80 = arith.constant dense<0.000000e+00> : vector<2x8x8xf32>
    %189 = tpu.matmul %178, %183, %cst_80 {dimension_numbers = #tpu.dot_dimension_numbers<[2], [2], [1], [1], [0, 0, 0, 1, 1, 1], [0], [0]>} : vector<2x8x16xbf16>, vector<2x8x16xbf16>, vector<2x8x8xf32> -> vector<2x8x8xf32>
    %cst_81 = arith.constant dense<0xFF800000> : vector<2x8xf32>
    %190 = vector.multi_reduction <maximumf>, %189, %cst_81 [2] : vector<2x8x8xf32> to vector<2x8xf32>
    %191 = vector.shape_cast %190 : vector<2x8xf32> to vector<2x8x1xf32>
    %192 = vector.broadcast %191 : vector<2x8x1xf32> to vector<2x8x8xf32>
    %193 = arith.subf %189, %192 : vector<2x8x8xf32>
    %194 = math.exp %193 : vector<2x8x8xf32>
    %cst_82 = arith.constant dense<0.000000e+00> : vector<2x8xf32>
    %195 = vector.multi_reduction <add>, %194, %cst_82 [2] : vector<2x8x8xf32> to vector<2x8xf32>
    %196 = vector.shape_cast %195 : vector<2x8xf32> to vector<2x8x1xf32>
    %197 = vector.broadcast %196 : vector<2x8x1xf32> to vector<2x8x8xf32>
    %198 = arith.divf %194, %197 : vector<2x8x8xf32>
    %199 = arith.truncf %198 : vector<2x8x8xf32> to vector<2x8x8xbf16>
    %cst_83 = arith.constant dense<0.000000e+00> : vector<2x8x16xf32>
    %200 = tpu.matmul %199, %188, %cst_83 {dimension_numbers = #tpu.dot_dimension_numbers<[2], [1], [1], [2], [0, 0, 0, 1, 1, 2], [0], [0]>} : vector<2x8x8xbf16>, vector<2x8x16xbf16>, vector<2x8x16xf32> -> vector<2x8x16xf32>
    %201 = arith.truncf %200 : vector<2x8x16xf32> to vector<2x8x16xbf16>
    %c1_84 = arith.constant 1 : index
    %c0_85 = arith.constant 0 : index
    %c0_86 = arith.constant 0 : index
    %c0_87 = arith.constant 0 : index
    %202 = vector.load %arg8[%c1_84, %c0_85, %c0_86, %c0_87] : memref<2x2x16x32xbf16, #tpu.memory_space<vmem>>, vector<1x2x16x32xbf16>
    %203 = vector.shape_cast %202 : vector<1x2x16x32xbf16> to vector<2x16x32xbf16>
    %cst_88 = arith.constant dense<0.000000e+00> : vector<2x8x32xf32>
    %204 = tpu.matmul %201, %203, %cst_88 {dimension_numbers = #tpu.dot_dimension_numbers<[2], [1], [1], [2], [0, 0, 0, 1, 1, 2], [0], [0]>} : vector<2x8x16xbf16>, vector<2x16x32xbf16>, vector<2x8x32xf32> -> vector<2x8x32xf32>
    %cst_89 = arith.constant dense<0.000000e+00> : vector<8x32xf32>
    %205 = vector.multi_reduction <add>, %204, %cst_89 [0] : vector<2x8x32xf32> to vector<8x32xf32>
    %c1_90 = arith.constant 1 : index
    %c0_91 = arith.constant 0 : index
    %c0_92 = arith.constant 0 : index
    %206 = vector.load %arg9[%c1_90, %c0_91, %c0_92] : memref<2x1x32xf32, #tpu.memory_space<vmem>>, vector<1x1x32xf32>
    %207 = vector.shape_cast %206 : vector<1x1x32xf32> to vector<1x32xf32>
    %208 = vector.broadcast %207 : vector<1x32xf32> to vector<8x32xf32>
    %209 = arith.addf %205, %208 : vector<8x32xf32>
    %210 = arith.addf %161, %209 : vector<8x32xf32>
    %c1_93 = arith.constant 1 : index
    %c0_94 = arith.constant 0 : index
    %c0_95 = arith.constant 0 : index
    %211 = vector.load %arg10[%c1_93, %c0_94, %c0_95] : memref<2x1x32xf32, #tpu.memory_space<vmem>>, vector<1x1x32xf32>
    %212 = vector.shape_cast %211 : vector<1x1x32xf32> to vector<1x32xf32>
    %c1_96 = arith.constant 1 : index
    %c0_97 = arith.constant 0 : index
    %c0_98 = arith.constant 0 : index
    %213 = vector.load %arg11[%c1_96, %c0_97, %c0_98] : memref<2x1x32xf32, #tpu.memory_space<vmem>>, vector<1x1x32xf32>
    %214 = vector.shape_cast %213 : vector<1x1x32xf32> to vector<1x32xf32>
    %cst_99 = arith.constant dense<0.000000e+00> : vector<8xf32>
    %215 = vector.multi_reduction <add>, %210, %cst_99 [1] : vector<8x32xf32> to vector<8xf32>
    %216 = vector.shape_cast %215 : vector<8xf32> to vector<8x1xf32>
    %cst_100 = arith.constant 3.200000e+01 : f32
    %217 = vector.broadcast %cst_100 : f32 to vector<8x1xf32>
    %218 = arith.divf %216, %217 : vector<8x1xf32>
    %219 = vector.broadcast %218 : vector<8x1xf32> to vector<8x32xf32>
    %220 = arith.subf %210, %219 : vector<8x32xf32>
    %221 = arith.mulf %220, %220 : vector<8x32xf32>
    %cst_101 = arith.constant dense<0.000000e+00> : vector<8xf32>
    %222 = vector.multi_reduction <add>, %221, %cst_101 [1] : vector<8x32xf32> to vector<8xf32>
    %223 = vector.shape_cast %222 : vector<8xf32> to vector<8x1xf32>
    %cst_102 = arith.constant 3.200000e+01 : f32
    %224 = vector.broadcast %cst_102 : f32 to vector<8x1xf32>
    %225 = arith.divf %223, %224 : vector<8x1xf32>
    %226 = vector.broadcast %218 : vector<8x1xf32> to vector<8x32xf32>
    %227 = arith.subf %210, %226 : vector<8x32xf32>
    %cst_103 = arith.constant 9.99999996E-13 : f32
    %228 = vector.broadcast %cst_103 : f32 to vector<8x1xf32>
    %229 = arith.addf %225, %228 : vector<8x1xf32>
    %230 = math.rsqrt %229 : vector<8x1xf32>
    %231 = vector.broadcast %230 : vector<8x1xf32> to vector<8x32xf32>
    %232 = arith.mulf %227, %231 : vector<8x32xf32>
    %233 = vector.broadcast %212 : vector<1x32xf32> to vector<8x32xf32>
    %234 = arith.mulf %232, %233 : vector<8x32xf32>
    %235 = vector.broadcast %214 : vector<1x32xf32> to vector<8x32xf32>
    %236 = arith.addf %234, %235 : vector<8x32xf32>
    %237 = arith.truncf %236 : vector<8x32xf32> to vector<8x32xbf16>
    %c1_104 = arith.constant 1 : index
    %c0_105 = arith.constant 0 : index
    %c0_106 = arith.constant 0 : index
    %238 = vector.load %arg12[%c1_104, %c0_105, %c0_106] : memref<2x32x128xbf16, #tpu.memory_space<vmem>>, vector<1x32x128xbf16>
    %239 = vector.shape_cast %238 : vector<1x32x128xbf16> to vector<32x128xbf16>
    %cst_107 = arith.constant dense<0.000000e+00> : vector<8x128xf32>
    %240 = tpu.matmul %237, %239, %cst_107 {dimension_numbers = #tpu.dot_dimension_numbers<[1], [0], [0], [1], [0, 0, 1, 1], [], []>} : vector<8x32xbf16>, vector<32x128xbf16>, vector<8x128xf32> -> vector<8x128xf32>
    %c1_108 = arith.constant 1 : index
    %c0_109 = arith.constant 0 : index
    %c0_110 = arith.constant 0 : index
    %241 = vector.load %arg13[%c1_108, %c0_109, %c0_110] : memref<2x1x128xf32, #tpu.memory_space<vmem>>, vector<1x1x128xf32>
    %242 = vector.shape_cast %241 : vector<1x1x128xf32> to vector<1x128xf32>
    %243 = vector.broadcast %242 : vector<1x128xf32> to vector<8x128xf32>
    %244 = arith.addf %240, %243 : vector<8x128xf32>
    %245 = arith.mulf %244, %244 : vector<8x128xf32>
    %246 = arith.mulf %244, %245 : vector<8x128xf32>
    %cst_111 = arith.constant 4.471500e-02 : f32
    %247 = vector.broadcast %cst_111 : f32 to vector<8x128xf32>
    %248 = arith.mulf %247, %246 : vector<8x128xf32>
    %249 = arith.addf %244, %248 : vector<8x128xf32>
    %cst_112 = arith.constant 0.797884583 : f32
    %250 = vector.broadcast %cst_112 : f32 to vector<8x128xf32>
    %251 = arith.mulf %250, %249 : vector<8x128xf32>
    %252 = math.tanh %251 : vector<8x128xf32>
    %cst_113 = arith.constant 1.000000e+00 : f32
    %253 = vector.broadcast %cst_113 : f32 to vector<8x128xf32>
    %254 = arith.addf %253, %252 : vector<8x128xf32>
    %cst_114 = arith.constant 5.000000e-01 : f32
    %255 = vector.broadcast %cst_114 : f32 to vector<8x128xf32>
    %256 = arith.mulf %255, %254 : vector<8x128xf32>
    %257 = arith.mulf %244, %256 : vector<8x128xf32>
    %258 = arith.truncf %257 : vector<8x128xf32> to vector<8x128xbf16>
    %c1_115 = arith.constant 1 : index
    %c0_116 = arith.constant 0 : index
    %c0_117 = arith.constant 0 : index
    %259 = vector.load %arg14[%c1_115, %c0_116, %c0_117] : memref<2x128x32xbf16, #tpu.memory_space<vmem>>, vector<1x128x32xbf16>
    %260 = vector.shape_cast %259 : vector<1x128x32xbf16> to vector<128x32xbf16>
    %cst_118 = arith.constant dense<0.000000e+00> : vector<8x32xf32>
    %261 = tpu.matmul %258, %260, %cst_118 {dimension_numbers = #tpu.dot_dimension_numbers<[1], [0], [0], [1], [0, 0, 1, 1], [], []>} : vector<8x128xbf16>, vector<128x32xbf16>, vector<8x32xf32> -> vector<8x32xf32>
    %c1_119 = arith.constant 1 : index
    %c0_120 = arith.constant 0 : index
    %c0_121 = arith.constant 0 : index
    %262 = vector.load %arg15[%c1_119, %c0_120, %c0_121] : memref<2x1x32xf32, #tpu.memory_space<vmem>>, vector<1x1x32xf32>
    %263 = vector.shape_cast %262 : vector<1x1x32xf32> to vector<1x32xf32>
    %264 = vector.broadcast %263 : vector<1x32xf32> to vector<8x32xf32>
    %265 = arith.addf %261, %264 : vector<8x32xf32>
    %266 = arith.addf %236, %265 : vector<8x32xf32>
    %c1_122 = arith.constant 1 : index
    %c0_123 = arith.constant 0 : index
    %c0_124 = arith.constant 0 : index
    %267 = vector.load %arg16[%c1_122, %c0_123, %c0_124] : memref<2x1x32xf32, #tpu.memory_space<vmem>>, vector<1x1x32xf32>
    %268 = vector.shape_cast %267 : vector<1x1x32xf32> to vector<1x32xf32>
    %c1_125 = arith.constant 1 : index
    %c0_126 = arith.constant 0 : index
    %c0_127 = arith.constant 0 : index
    %269 = vector.load %arg17[%c1_125, %c0_126, %c0_127] : memref<2x1x32xf32, #tpu.memory_space<vmem>>, vector<1x1x32xf32>
    %270 = vector.shape_cast %269 : vector<1x1x32xf32> to vector<1x32xf32>
    %cst_128 = arith.constant dense<0.000000e+00> : vector<8xf32>
    %271 = vector.multi_reduction <add>, %266, %cst_128 [1] : vector<8x32xf32> to vector<8xf32>
    %272 = vector.shape_cast %271 : vector<8xf32> to vector<8x1xf32>
    %cst_129 = arith.constant 3.200000e+01 : f32
    %273 = vector.broadcast %cst_129 : f32 to vector<8x1xf32>
    %274 = arith.divf %272, %273 : vector<8x1xf32>
    %275 = vector.broadcast %274 : vector<8x1xf32> to vector<8x32xf32>
    %276 = arith.subf %266, %275 : vector<8x32xf32>
    %277 = arith.mulf %276, %276 : vector<8x32xf32>
    %cst_130 = arith.constant dense<0.000000e+00> : vector<8xf32>
    %278 = vector.multi_reduction <add>, %277, %cst_130 [1] : vector<8x32xf32> to vector<8xf32>
    %279 = vector.shape_cast %278 : vector<8xf32> to vector<8x1xf32>
    %cst_131 = arith.constant 3.200000e+01 : f32
    %280 = vector.broadcast %cst_131 : f32 to vector<8x1xf32>
    %281 = arith.divf %279, %280 : vector<8x1xf32>
    %282 = vector.broadcast %274 : vector<8x1xf32> to vector<8x32xf32>
    %283 = arith.subf %266, %282 : vector<8x32xf32>
    %cst_132 = arith.constant 9.99999996E-13 : f32
    %284 = vector.broadcast %cst_132 : f32 to vector<8x1xf32>
    %285 = arith.addf %281, %284 : vector<8x1xf32>
    %286 = math.rsqrt %285 : vector<8x1xf32>
    %287 = vector.broadcast %286 : vector<8x1xf32> to vector<8x32xf32>
    %288 = arith.mulf %283, %287 : vector<8x32xf32>
    %289 = vector.broadcast %268 : vector<1x32xf32> to vector<8x32xf32>
    %290 = arith.mulf %288, %289 : vector<8x32xf32>
    %291 = vector.broadcast %270 : vector<1x32xf32> to vector<8x32xf32>
    %292 = arith.addf %290, %291 : vector<8x32xf32>
    %c0_133 = arith.constant 0 : index
    %c0_134 = arith.constant 0 : index
    %c0_135 = arith.constant 0 : index
    %293 = vector.load %arg18[%c0_133, %c0_134, %c0_135] : memref<1x8x32xf32, #tpu.memory_space<vmem>>, vector<1x8x32xf32>
    %294 = vector.shape_cast %293 : vector<1x8x32xf32> to vector<8x32xf32>
    %295 = vector.shape_cast %292 : vector<8x32xf32> to vector<1x8x32xf32>
    tpu.vector_store %arg18[%c0_133, %c0_134, %c0_135], %295 {strides = array<i32>} : memref<1x8x32xf32, #tpu.memory_space<vmem>>, vector<1x8x32xf32>,
    return
  }
  func.func @transform_0(%arg0: i32) -> (i32, i32, i32) {
    %c0_i32 = arith.constant 0 : i32
    %c0_i32_0 = arith.constant 0 : i32
    %c0_i32_1 = arith.constant 0 : i32
    return %arg0, %c0_i32, %c0_i32_0 : i32, i32, i32
  }
  func.func @transform_1(%arg0: i32) -> (i32, i32) {
    %c0_i32 = arith.constant 0 : i32
    %c0_i32_0 = arith.constant 0 : i32
    %c0_i32_1 = arith.constant 0 : i32
    return %c0_i32, %c0_i32_0 : i32, i32
  }
  func.func @transform_2(%arg0: i32) -> (i32, i32) {
    %c0_i32 = arith.constant 0 : i32
    %c0_i32_0 = arith.constant 0 : i32
    %c0_i32_1 = arith.constant 0 : i32
    return %c0_i32, %c0_i32_0 : i32, i32
  }
  func.func @transform_3(%arg0: i32) -> (i32, i32) {
    %c0_i32 = arith.constant 0 : i32
    %c0_i32_0 = arith.constant 0 : i32
    %c0_i32_1 = arith.constant 0 : i32
    return %c0_i32, %c0_i32_0 : i32, i32
  }
  func.func @transform_4(%arg0: i32) -> (i32, i32) {
    %c0_i32 = arith.constant 0 : i32
    %c0_i32_0 = arith.constant 0 : i32
    %c0_i32_1 = arith.constant 0 : i32
    return %c0_i32, %c0_i32_0 : i32, i32
  }
  func.func @transform_5(%arg0: i32) -> (i32, i32, i32) {
    %c0_i32 = arith.constant 0 : i32
    %c0_i32_0 = arith.constant 0 : i32
    %c0_i32_1 = arith.constant 0 : i32
    %c0_i32_2 = arith.constant 0 : i32
    return %c0_i32, %c0_i32_0, %c0_i32_1 : i32, i32, i32
  }
  func.func @transform_6(%arg0: i32) -> (i32, i32, i32) {
    %c0_i32 = arith.constant 0 : i32
    %c0_i32_0 = arith.constant 0 : i32
    %c0_i32_1 = arith.constant 0 : i32
    %c0_i32_2 = arith.constant 0 : i32
    return %c0_i32, %c0_i32_0, %c0_i32_1 : i32, i32, i32
  }
  func.func @transform_7(%arg0: i32) -> (i32, i32, i32, i32) {
    %c0_i32 = arith.constant 0 : i32
    %c0_i32_0 = arith.constant 0 : i32
    %c0_i32_1 = arith.constant 0 : i32
    %c0_i32_2 = arith.constant 0 : i32
    %c0_i32_3 = arith.constant 0 : i32
    return %c0_i32, %c0_i32_0, %c0_i32_1, %c0_i32_2 : i32, i32, i32, i32
  }
  func.func @transform_8(%arg0: i32) -> (i32, i32, i32) {
    %c0_i32 = arith.constant 0 : i32
    %c0_i32_0 = arith.constant 0 : i32
    %c0_i32_1 = arith.constant 0 : i32
    %c0_i32_2 = arith.constant 0 : i32
    return %c0_i32, %c0_i32_0, %c0_i32_1 : i32, i32, i32
  }
  func.func @transform_9(%arg0: i32) -> (i32, i32, i32) {
    %c0_i32 = arith.constant 0 : i32
    %c0_i32_0 = arith.constant 0 : i32
    %c0_i32_1 = arith.constant 0 : i32
    %c0_i32_2 = arith.constant 0 : i32
    return %c0_i32, %c0_i32_0, %c0_i32_1 : i32, i32, i32
  }
  func.func @transform_10(%arg0: i32) -> (i32, i32, i32) {
    %c0_i32 = arith.constant 0 : i32
    %c0_i32_0 = arith.constant 0 : i32
    %c0_i32_1 = arith.constant 0 : i32
    %c0_i32_2 = arith.constant 0 : i32
    return %c0_i32, %c0_i32_0, %c0_i32_1 : i32, i32, i32
  }
  func.func @transform_11(%arg0: i32) -> (i32, i32, i32) {
    %c0_i32 = arith.constant 0 : i32
    %c0_i32_0 = arith.constant 0 : i32
    %c0_i32_1 = arith.constant 0 : i32
    %c0_i32_2 = arith.constant 0 : i32
    return %c0_i32, %c0_i32_0, %c0_i32_1 : i32, i32, i32
  }
  func.func @transform_12(%arg0: i32) -> (i32, i32, i32) {
    %c0_i32 = arith.constant 0 : i32
    %c0_i32_0 = arith.constant 0 : i32
    %c0_i32_1 = arith.constant 0 : i32
    %c0_i32_2 = arith.constant 0 : i32
    return %c0_i32, %c0_i32_0, %c0_i32_1 : i32, i32, i32
  }
  func.func @transform_13(%arg0: i32) -> (i32, i32, i32) {
    %c0_i32 = arith.constant 0 : i32
    %c0_i32_0 = arith.constant 0 : i32
    %c0_i32_1 = arith.constant 0 : i32
    %c0_i32_2 = arith.constant 0 : i32
    return %c0_i32, %c0_i32_0, %c0_i32_1 : i32, i32, i32
  }
  func.func @transform_14(%arg0: i32) -> (i32, i32, i32) {
    %c0_i32 = arith.constant 0 : i32
    %c0_i32_0 = arith.constant 0 : i32
    %c0_i32_1 = arith.constant 0 : i32
    %c0_i32_2 = arith.constant 0 : i32
    return %c0_i32, %c0_i32_0, %c0_i32_1 : i32, i32, i32
  }
  func.func @transform_15(%arg0: i32) -> (i32, i32, i32) {
    %c0_i32 = arith.constant 0 : i32
    %c0_i32_0 = arith.constant 0 : i32
    %c0_i32_1 = arith.constant 0 : i32
    %c0_i32_2 = arith.constant 0 : i32
    return %c0_i32, %c0_i32_0, %c0_i32_1 : i32, i32, i32
  }
  func.func @transform_16(%arg0: i32) -> (i32, i32, i32) {
    %c0_i32 = arith.constant 0 : i32
    %c0_i32_0 = arith.constant 0 : i32
    %c0_i32_1 = arith.constant 0 : i32
    %c0_i32_2 = arith.constant 0 : i32
    return %c0_i32, %c0_i32_0, %c0_i32_1 : i32, i32, i32
  }
  func.func @transform_17(%arg0: i32) -> (i32, i32, i32) {
    %c0_i32 = arith.constant 0 : i32
    %c0_i32_0 = arith.constant 0 : i32
    %c0_i32_1 = arith.constant 0 : i32
    return %arg0, %c0_i32, %c0_i32_0 : i32, i32, i32
  }
}

</mosaic_0001>

<llo_original>
// kernel: tpu_custom_call.1
$region0: #{tpu_custom_call.1}
  #allocation0 [shape = 'u32[]', space=smem, size = 0x4, offset = 0x4, fixed_abs, tag = 'smem constant byte address 0x4 - core index']
  #allocation1 [shape = 'u32[144,128]{1,0:T(1,128)}', space=vmem, size = 0x12000, scoped, tag = 'internal scratch']
  %s0 = inlined_call_operand.vmem [shape: f32[2,8,32], index: 0, kind: input, shape index: {}]
  %s1 = inlined_call_operand.vmem [shape: f32[8,32], index: 1, kind: input, shape index: {}]
  %s2 = inlined_call_operand.vmem [shape: f32[1,32], index: 2, kind: input, shape index: {}]
  %s3 = inlined_call_operand.vmem [shape: f32[1,32], index: 3, kind: input, shape index: {}]
  %s4 = inlined_call_operand.vmem [shape: f32[1,32], index: 4, kind: input, shape index: {}]
  %s5 = inlined_call_operand.vmem [shape: bf16[2,32,96], index: 5, kind: input, shape index: {}]
  %s6 = inlined_call_operand.vmem [shape: f32[2,1,96], index: 6, kind: input, shape index: {}]
  %s7 = inlined_call_operand.vmem [shape: bf16[2,2,16,32], index: 7, kind: input, shape index: {}]
  %s8 = inlined_call_operand.vmem [shape: f32[2,1,32], index: 8, kind: input, shape index: {}]
  %s9 = inlined_call_operand.vmem [shape: f32[2,1,32], index: 9, kind: input, shape index: {}]
  %s10 = inlined_call_operand.vmem [shape: f32[2,1,32], index: 10, kind: input, shape index: {}]
  %s11 = inlined_call_operand.vmem [shape: bf16[2,32,128], index: 11, kind: input, shape index: {}]
  %s12 = inlined_call_operand.vmem [shape: f32[2,1,128], index: 12, kind: input, shape index: {}]
  %s13 = inlined_call_operand.vmem [shape: bf16[2,128,32], index: 13, kind: input, shape index: {}]
  %s14 = inlined_call_operand.vmem [shape: f32[2,1,32], index: 14, kind: input, shape index: {}]
  %s15 = inlined_call_operand.vmem [shape: f32[2,1,32], index: 15, kind: input, shape index: {}]
  %s16 = inlined_call_operand.vmem [shape: f32[2,1,32], index: 16, kind: input, shape index: {}]
  %s17 = inlined_call_operand.hbm [shape: f32[2,8,32], index: 17, kind: output, shape index: {}]
  %s18 = sld [smem:[#allocation0]]
  $region101: #{tpu_custom_call.1} parent=0
    _
  %s20 = ssub.s32 1, %s18
  %s21 = scalar_select 0, %s20, %s18
  $region1: #{tpu_custom_call.1} parent=0
    #allocation2 [shape = 'u8[8192]{0}', space=vmem, size = 0x2000, scoped, tag = 'output window, operand 0']
    #allocation3 [shape = 's32[2]{0}', space=sflag, size = 0x8, scoped, tag = 'scoped memory for tpu_custom_call.1']
    %22 = vsyncpa [#allocation3], 0
    %s23 = scalar_lea.sflag [#allocation3], 1
    %24 = vsyncpa %s23, 0
    loop: start=0, step=1, limit=4
    $region2: #{tpu_custom_call.1} parent=1 // loop_pre_header
      _
    $region3: #{tpu_custom_call.1} parent=1 // loop_header
      %s26 = sphi 0, %s30
      %p27 = scmp.ge.s32.totalorder %s26, 4
      %s36 = sphi 0, %s38
      %s39 = sphi 0, %s36
      %s40 = sphi 0, %s39
      %s56 = sphi 0, %s40
      %s60 = sphi 0, %s60
      %s62 = sphi 0, %s60
      %s63 = sphi 0, %s62
      %s77 = sphi 0, %s63
      %s81 = sphi 0, %s81
      %s83 = sphi 0, %s81
      %s84 = sphi 0, %s83
      %s98 = sphi 0, %s84
      %s102 = sphi 0, %s102
      %s104 = sphi 0, %s102
      %s105 = sphi 0, %s104
      %s119 = sphi 0, %s105
      %s123 = sphi 0, %s123
      %s125 = sphi 0, %s123
      %s126 = sphi 0, %s125
      %s140 = sphi 0, %s126
      %s144 = sphi 0, %s144
      %s146 = sphi 0, %s144
      %s147 = sphi 0, %s146
      %s161 = sphi 0, %s147
      %s165 = sphi 0, %s165
      %s167 = sphi 0, %s165
      %s168 = sphi 0, %s167
      %s182 = sphi 0, %s168
      %s186 = sphi 0, %s186
      %s188 = sphi 0, %s186
      %s189 = sphi 0, %s188
      %s203 = sphi 0, %s189
      %s207 = sphi 0, %s207
      %s209 = sphi 0, %s207
      %s210 = sphi 0, %s209
      %s224 = sphi 0, %s210
      %s228 = sphi 0, %s228
      %s230 = sphi 0, %s228
      %s231 = sphi 0, %s230
      %s245 = sphi 0, %s231
      %s249 = sphi 0, %s249
      %s251 = sphi 0, %s249
      %s252 = sphi 0, %s251
      %s266 = sphi 0, %s252
      %s270 = sphi 0, %s270
      %s272 = sphi 0, %s270
      %s273 = sphi 0, %s272
      %s287 = sphi 0, %s273
      %s291 = sphi 0, %s291
      %s293 = sphi 0, %s291
      %s294 = sphi 0, %s293
      %s308 = sphi 0, %s294
      %s312 = sphi 0, %s312
      %s314 = sphi 0, %s312
      %s315 = sphi 0, %s314
      %s329 = sphi 0, %s315
      %s333 = sphi 0, %s333
      %s335 = sphi 0, %s333
      %s336 = sphi 0, %s335
      %s350 = sphi 0, %s336
      %s354 = sphi 0, %s354
      %s356 = sphi 0, %s354
      %s357 = sphi 0, %s356
      %s371 = sphi 0, %s357
      %s375 = sphi 0, %s375
      %s377 = sphi 0, %s375
      %s378 = sphi 0, %s377
      %s392 = sphi 0, %s378
      %s398 = sphi 0, %s400
      %s401 = sphi 0, %s398
      %s402 = sphi 0, %s401
      %s418 = sphi 0, %s402
    $region4: #{tpu_custom_call.1} parent=1 // loop_header_branch
      %29 = sbr.rel (%p27) target = $region8
    $region5: #{tpu_custom_call.1} parent=1 // loop_body
      %s31 = ssub.s32 %s26, 1
      %s32 = ssub.s32 %s26, 2
      %s33 = sadd.s32 %s26, 1
      %s34 = ssub.s32 %s26, %s33
      %p35 = scmp.eq.s32.totalorder %s34, 0
      %s37 = sadd.s32 %s36, 1
      %s38 = scalar_select %p35, %s36, %s37
      %p41 = pneg %p35
      %p42 = scmp.eq.s32.totalorder %s26, 1
      %p43 = por %p41, %p42
      %p44 = scmp.ne.s32.totalorder %s36, %s39
      %p45 = scmp.eq.s32.totalorder %s26, 0
      %p46 = por %p44, %p45
      %p47 = scmp.ne.s32.totalorder %s36, %s39
      %p48 = scmp.eq.s32.totalorder %s31, 1
      %p49 = por %p47, %p48
      %p50 = scmp.ne.s32.totalorder %s39, %s40
      %p51 = scmp.eq.s32.totalorder %s31, 0
      %p52 = por %p50, %p51
      %p53 = scmp.ne.s32.totalorder %s39, %s40
      %p54 = scmp.eq.s32.totalorder %s32, 1
      %p55 = por %p53, %p54
      %p57 = scmp.ne.s32.totalorder %s40, %s56
      %p58 = scmp.eq.s32.totalorder %s32, 0
      %p59 = por %p57, %p58
      %s61 = sadd.s32 %s60, 1
      %p64 = scmp.eq.s32.totalorder %s26, 1
      %p65 = scmp.ne.s32.totalorder %s60, %s62
      %p66 = scmp.eq.s32.totalorder %s26, 0
      %p67 = por %p65, %p66
      %p68 = scmp.ne.s32.totalorder %s60, %s62
      %p69 = scmp.eq.s32.totalorder %s31, 1
      %p70 = por %p68, %p69
      %p71 = scmp.ne.s32.totalorder %s62, %s63
      %p72 = scmp.eq.s32.totalorder %s31, 0
      %p73 = por %p71, %p72
      %p74 = scmp.ne.s32.totalorder %s62, %s63
      %p75 = scmp.eq.s32.totalorder %s32, 1
      %p76 = por %p74, %p75
      %p78 = scmp.ne.s32.totalorder %s63, %s77
      %p79 = scmp.eq.s32.totalorder %s32, 0
      %p80 = por %p78, %p79
      %s82 = sadd.s32 %s81, 1
      %p85 = scmp.eq.s32.totalorder %s26, 1
      %p86 = scmp.ne.s32.totalorder %s81, %s83
      %p87 = scmp.eq.s32.totalorder %s26, 0
      %p88 = por %p86, %p87
      %p89 = scmp.ne.s32.totalorder %s81, %s83
      %p90 = scmp.eq.s32.totalorder %s31, 1
      %p91 = por %p89, %p90
      %p92 = scmp.ne.s32.totalorder %s83, %s84
      %p93 = scmp.eq.s32.totalorder %s31, 0
      %p94 = por %p92, %p93
      %p95 = scmp.ne.s32.totalorder %s83, %s84
      %p96 = scmp.eq.s32.totalorder %s32, 1
      %p97 = por %p95, %p96
      %p99 = scmp.ne.s32.totalorder %s84, %s98
      %p100 = scmp.eq.s32.totalorder %s32, 0
      %p101 = por %p99, %p100
      %s103 = sadd.s32 %s102, 1
      %p106 = scmp.eq.s32.totalorder %s26, 1
      %p107 = scmp.ne.s32.totalorder %s102, %s104
      %p108 = scmp.eq.s32.totalorder %s26, 0
      %p109 = por %p107, %p108
      %p110 = scmp.ne.s32.totalorder %s102, %s104
      %p111 = scmp.eq.s32.totalorder %s31, 1
      %p112 = por %p110, %p111
      %p113 = scmp.ne.s32.totalorder %s104, %s105
      %p114 = scmp.eq.s32.totalorder %s31, 0
      %p115 = por %p113, %p114
      %p116 = scmp.ne.s32.totalorder %s104, %s105
      %p117 = scmp.eq.s32.totalorder %s32, 1
      %p118 = por %p116, %p117
      %p120 = scmp.ne.s32.totalorder %s105, %s119
      %p121 = scmp.eq.s32.totalorder %s32, 0
      %p122 = por %p120, %p121
      %s124 = sadd.s32 %s123, 1
      %p127 = scmp.eq.s32.totalorder %s26, 1
      %p128 = scmp.ne.s32.totalorder %s123, %s125
      %p129 = scmp.eq.s32.totalorder %s26, 0
      %p130 = por %p128, %p129
      %p131 = scmp.ne.s32.totalorder %s123, %s125
      %p132 = scmp.eq.s32.totalorder %s31, 1
      %p133 = por %p131, %p132
      %p134 = scmp.ne.s32.totalorder %s125, %s126
      %p135 = scmp.eq.s32.totalorder %s31, 0
      %p136 = por %p134, %p135
      %p137 = scmp.ne.s32.totalorder %s125, %s126
      %p138 = scmp.eq.s32.totalorder %s32, 1
      %p139 = por %p137, %p138
      %p141 = scmp.ne.s32.totalorder %s126, %s140
      %p142 = scmp.eq.s32.totalorder %s32, 0
      %p143 = por %p141, %p142
      %s145 = sadd.s32 %s144, 1
      %p148 = scmp.eq.s32.totalorder %s26, 1
      %p149 = scmp.ne.s32.totalorder %s144, %s146
      %p150 = scmp.eq.s32.totalorder %s26, 0
      %p151 = por %p149, %p150
      %p152 = scmp.ne.s32.totalorder %s144, %s146
      %p153 = scmp.eq.s32.totalorder %s31, 1
      %p154 = por %p152, %p153
      %p155 = scmp.ne.s32.totalorder %s146, %s147
      %p156 = scmp.eq.s32.totalorder %s31, 0
      %p157 = por %p155, %p156
      %p158 = scmp.ne.s32.totalorder %s146, %s147
      %p159 = scmp.eq.s32.totalorder %s32, 1
      %p160 = por %p158, %p159
      %p162 = scmp.ne.s32.totalorder %s147, %s161
      %p163 = scmp.eq.s32.totalorder %s32, 0
      %p164 = por %p162, %p163
      %s166 = sadd.s32 %s165, 1
      %p169 = scmp.eq.s32.totalorder %s26, 1
      %p170 = scmp.ne.s32.totalorder %s165, %s167
      %p171 = scmp.eq.s32.totalorder %s26, 0
      %p172 = por %p170, %p171
      %p173 = scmp.ne.s32.totalorder %s165, %s167
      %p174 = scmp.eq.s32.totalorder %s31, 1
      %p175 = por %p173, %p174
      %p176 = scmp.ne.s32.totalorder %s167, %s168
      %p177 = scmp.eq.s32.totalorder %s31, 0
      %p178 = por %p176, %p177
      %p179 = scmp.ne.s32.totalorder %s167, %s168
      %p180 = scmp.eq.s32.totalorder %s32, 1
      %p181 = por %p179, %p180
      %p183 = scmp.ne.s32.totalorder %s168, %s182
      %p184 = scmp.eq.s32.totalorder %s32, 0
      %p185 = por %p183, %p184
      %s187 = sadd.s32 %s186, 1
      %p190 = scmp.eq.s32.totalorder %s26, 1
      %p191 = scmp.ne.s32.totalorder %s186, %s188
      %p192 = scmp.eq.s32.totalorder %s26, 0
      %p193 = por %p191, %p192
      %p194 = scmp.ne.s32.totalorder %s186, %s188
      %p195 = scmp.eq.s32.totalorder %s31, 1
      %p196 = por %p194, %p195
      %p197 = scmp.ne.s32.totalorder %s188, %s189
      %p198 = scmp.eq.s32.totalorder %s31, 0
      %p199 = por %p197, %p198
      %p200 = scmp.ne.s32.totalorder %s188, %s189
      %p201 = scmp.eq.s32.totalorder %s32, 1
      %p202 = por %p200, %p201
      %p204 = scmp.ne.s32.totalorder %s189, %s203
      %p205 = scmp.eq.s32.totalorder %s32, 0
      %p206 = por %p204, %p205
      %s208 = sadd.s32 %s207, 1
      %p211 = scmp.eq.s32.totalorder %s26, 1
      %p212 = scmp.ne.s32.totalorder %s207, %s209
      %p213 = scmp.eq.s32.totalorder %s26, 0
      %p214 = por %p212, %p213
      %p215 = scmp.ne.s32.totalorder %s207, %s209
      %p216 = scmp.eq.s32.totalorder %s31, 1
      %p217 = por %p215, %p216
      %p218 = scmp.ne.s32.totalorder %s209, %s210
      %p219 = scmp.eq.s32.totalorder %s31, 0
      %p220 = por %p218, %p219
      %p221 = scmp.ne.s32.totalorder %s209, %s210
      %p222 = scmp.eq.s32.totalorder %s32, 1
      %p223 = por %p221, %p222
      %p225 = scmp.ne.s32.totalorder %s210, %s224
      %p226 = scmp.eq.s32.totalorder %s32, 0
      %p227 = por %p225, %p226
      %s229 = sadd.s32 %s228, 1
      %p232 = scmp.eq.s32.totalorder %s26, 1
      %p233 = scmp.ne.s32.totalorder %s228, %s230
      %p234 = scmp.eq.s32.totalorder %s26, 0
      %p235 = por %p233, %p234
      %p236 = scmp.ne.s32.totalorder %s228, %s230
      %p237 = scmp.eq.s32.totalorder %s31, 1
      %p238 = por %p236, %p237
      %p239 = scmp.ne.s32.totalorder %s230, %s231
      %p240 = scmp.eq.s32.totalorder %s31, 0
      %p241 = por %p239, %p240
      %p242 = scmp.ne.s32.totalorder %s230, %s231
      %p243 = scmp.eq.s32.totalorder %s32, 1
      %p244 = por %p242, %p243
      %p246 = scmp.ne.s32.totalorder %s231, %s245
      %p247 = scmp.eq.s32.totalorder %s32, 0
      %p248 = por %p246, %p247
      %s250 = sadd.s32 %s249, 1
      %p253 = scmp.eq.s32.totalorder %s26, 1
      %p254 = scmp.ne.s32.totalorder %s249, %s251
      %p255 = scmp.eq.s32.totalorder %s26, 0
      %p256 = por %p254, %p255
      %p257 = scmp.ne.s32.totalorder %s249, %s251
      %p258 = scmp.eq.s32.totalorder %s31, 1
      %p259 = por %p257, %p258
      %p260 = scmp.ne.s32.totalorder %s251, %s252
      %p261 = scmp.eq.s32.totalorder %s31, 0
      %p262 = por %p260, %p261
      %p263 = scmp.ne.s32.totalorder %s251, %s252
      %p264 = scmp.eq.s32.totalorder %s32, 1
      %p265 = por %p263, %p264
      %p267 = scmp.ne.s32.totalorder %s252, %s266
      %p268 = scmp.eq.s32.totalorder %s32, 0
      %p269 = por %p267, %p268
      %s271 = sadd.s32 %s270, 1
      %p274 = scmp.eq.s32.totalorder %s26, 1
      %p275 = scmp.ne.s32.totalorder %s270, %s272
      %p276 = scmp.eq.s32.totalorder %s26, 0
      %p277 = por %p275, %p276
      %p278 = scmp.ne.s32.totalorder %s270, %s272
      %p279 = scmp.eq.s32.totalorder %s31, 1
      %p280 = por %p278, %p279
      %p281 = scmp.ne.s32.totalorder %s272, %s273
      %p282 = scmp.eq.s32.totalorder %s31, 0
      %p283 = por %p281, %p282
      %p284 = scmp.ne.s32.totalorder %s272, %s273
      %p285 = scmp.eq.s32.totalorder %s32, 1
      %p286 = por %p284, %p285
      %p288 = scmp.ne.s32.totalorder %s273, %s287
      %p289 = scmp.eq.s32.totalorder %s32, 0
      %p290 = por %p288, %p289
      %s292 = sadd.s32 %s291, 1
      %p295 = scmp.eq.s32.totalorder %s26, 1
      %p296 = scmp.ne.s32.totalorder %s291, %s293
      %p297 = scmp.eq.s32.totalorder %s26, 0
      %p298 = por %p296, %p297
      %p299 = scmp.ne.s32.totalorder %s291, %s293
      %p300 = scmp.eq.s32.totalorder %s31, 1
      %p301 = por %p299, %p300
      %p302 = scmp.ne.s32.totalorder %s293, %s294
      %p303 = scmp.eq.s32.totalorder %s31, 0
      %p304 = por %p302, %p303
      %p305 = scmp.ne.s32.totalorder %s293, %s294
      %p306 = scmp.eq.s32.totalorder %s32, 1
      %p307 = por %p305, %p306
      %p309 = scmp.ne.s32.totalorder %s294, %s308
      %p310 = scmp.eq.s32.totalorder %s32, 0
      %p311 = por %p309, %p310
      %s313 = sadd.s32 %s312, 1
      %p316 = scmp.eq.s32.totalorder %s26, 1
      %p317 = scmp.ne.s32.totalorder %s312, %s314
      %p318 = scmp.eq.s32.totalorder %s26, 0
      %p319 = por %p317, %p318
      %p320 = scmp.ne.s32.totalorder %s312, %s314
      %p321 = scmp.eq.s32.totalorder %s31, 1
      %p322 = por %p320, %p321
      %p323 = scmp.ne.s32.totalorder %s314, %s315
      %p324 = scmp.eq.s32.totalorder %s31, 0
      %p325 = por %p323, %p324
      %p326 = scmp.ne.s32.totalorder %s314, %s315
      %p327 = scmp.eq.s32.totalorder %s32, 1
      %p328 = por %p326, %p327
      %p330 = scmp.ne.s32.totalorder %s315, %s329
      %p331 = scmp.eq.s32.totalorder %s32, 0
      %p332 = por %p330, %p331
      %s334 = sadd.s32 %s333, 1
      %p337 = scmp.eq.s32.totalorder %s26, 1
      %p338 = scmp.ne.s32.totalorder %s333, %s335
      %p339 = scmp.eq.s32.totalorder %s26, 0
      %p340 = por %p338, %p339
      %p341 = scmp.ne.s32.totalorder %s333, %s335
      %p342 = scmp.eq.s32.totalorder %s31, 1
      %p343 = por %p341, %p342
      %p344 = scmp.ne.s32.totalorder %s335, %s336
      %p345 = scmp.eq.s32.totalorder %s31, 0
      %p346 = por %p344, %p345
      %p347 = scmp.ne.s32.totalorder %s335, %s336
      %p348 = scmp.eq.s32.totalorder %s32, 1
      %p349 = por %p347, %p348
      %p351 = scmp.ne.s32.totalorder %s336, %s350
      %p352 = scmp.eq.s32.totalorder %s32, 0
      %p353 = por %p351, %p352
      %s355 = sadd.s32 %s354, 1
      %p358 = scmp.eq.s32.totalorder %s26, 1
      %p359 = scmp.ne.s32.totalorder %s354, %s356
      %p360 = scmp.eq.s32.totalorder %s26, 0
      %p361 = por %p359, %p360
      %p362 = scmp.ne.s32.totalorder %s354, %s356
      %p363 = scmp.eq.s32.totalorder %s31, 1
      %p364 = por %p362, %p363
      %p365 = scmp.ne.s32.totalorder %s356, %s357
      %p366 = scmp.eq.s32.totalorder %s31, 0
      %p367 = por %p365, %p366
      %p368 = scmp.ne.s32.totalorder %s356, %s357
      %p369 = scmp.eq.s32.totalorder %s32, 1
      %p370 = por %p368, %p369
      %p372 = scmp.ne.s32.totalorder %s357, %s371
      %p373 = scmp.eq.s32.totalorder %s32, 0
      %p374 = por %p372, %p373
      %s376 = sadd.s32 %s375, 1
      %p379 = scmp.eq.s32.totalorder %s26, 1
      %p380 = scmp.ne.s32.totalorder %s375, %s377
      %p381 = scmp.eq.s32.totalorder %s26, 0
      %p382 = por %p380, %p381
      %p383 = scmp.ne.s32.totalorder %s375, %s377
      %p384 = scmp.eq.s32.totalorder %s31, 1
      %p385 = por %p383, %p384
      %p386 = scmp.ne.s32.totalorder %s377, %s378
      %p387 = scmp.eq.s32.totalorder %s31, 0
      %p388 = por %p386, %p387
      %p389 = scmp.ne.s32.totalorder %s377, %s378
      %p390 = scmp.eq.s32.totalorder %s32, 1
      %p391 = por %p389, %p390
      %p393 = scmp.ne.s32.totalorder %s378, %s392
      %p394 = scmp.eq.s32.totalorder %s32, 0
      %p395 = por %p393, %p394
      %s396 = ssub.s32 %s26, %s33
      %p397 = scmp.eq.s32.totalorder %s396, 0
      %s399 = sadd.s32 %s398, 1
      %s400 = scalar_select %p397, %s398, %s399
      %p403 = pneg %p397
      %p404 = scmp.eq.s32.totalorder %s26, 1
      %p405 = por %p403, %p404
      %p406 = scmp.ne.s32.totalorder %s398, %s401
      %p407 = scmp.eq.s32.totalorder %s26, 0
      %p408 = por %p406, %p407
      %p409 = scmp.ne.s32.totalorder %s398, %s401
      %p410 = scmp.eq.s32.totalorder %s31, 1
      %p411 = por %p409, %p410
      %p412 = scmp.ne.s32.totalorder %s401, %s402
      %p413 = scmp.eq.s32.totalorder %s31, 0
      %p414 = por %p412, %p413
      %p415 = scmp.ne.s32.totalorder %s401, %s402
      %p416 = scmp.eq.s32.totalorder %s32, 1
      %p417 = por %p415, %p416
      %p419 = scmp.ne.s32.totalorder %s402, %s418
      %p420 = scmp.eq.s32.totalorder %s32, 0
      %p421 = por %p419, %p420
      %p422 = scmp.le.s32.totalorder 1, %s26
      %p423 = scmp.lt.s32.totalorder %s26, 3
      %p424 = pnand %p422, %p423
      %p425 = pneg %p424
      // Predicated region
      $region9: #{tpu_custom_call.1} parent=5 // pred_check
        _
      $region10: #{tpu_custom_call.1} parent=5 // pred_check_branch
        %427 = sbr.rel (%p424) target = $region12
      $region11: #{tpu_custom_call.1} parent=5 // pred_region
        %s428 = ssub.s32 %s26, 1
        // Predicated region
        $region13: #{tpu_custom_call.1} parent=11 // pred_check
          %p429 = pneg %p73
        $region14: #{tpu_custom_call.1} parent=11 // pred_check_branch
          %431 = sbr.rel (%p429) target = $region16
        $region15: #{tpu_custom_call.1} parent=11 // pred_region
          _
        $region16: #{tpu_custom_call.1} parent=11 // pred_fallthru
          _
        // Predicated region
        $region17: #{tpu_custom_call.1} parent=11 // pred_check
          %p432 = pneg %p94
        $region18: #{tpu_custom_call.1} parent=11 // pred_check_branch
          %434 = sbr.rel (%p432) target = $region20
        $region19: #{tpu_custom_call.1} parent=11 // pred_region
          _
        $region20: #{tpu_custom_call.1} parent=11 // pred_fallthru
          _
        // Predicated region
        $region21: #{tpu_custom_call.1} parent=11 // pred_check
          %p435 = pneg %p115
        $region22: #{tpu_custom_call.1} parent=11 // pred_check_branch
          %437 = sbr.rel (%p435) target = $region24
        $region23: #{tpu_custom_call.1} parent=11 // pred_region
          _
        $region24: #{tpu_custom_call.1} parent=11 // pred_fallthru
          _
        // Predicated region
        $region25: #{tpu_custom_call.1} parent=11 // pred_check
          %p438 = pneg %p136
        $region26: #{tpu_custom_call.1} parent=11 // pred_check_branch
          %440 = sbr.rel (%p438) target = $region28
        $region27: #{tpu_custom_call.1} parent=11 // pred_region
          _
        $region28: #{tpu_custom_call.1} parent=11 // pred_fallthru
          _
        // Predicated region
        $region29: #{tpu_custom_call.1} parent=11 // pred_check
          %p441 = pneg %p157
        $region30: #{tpu_custom_call.1} parent=11 // pred_check_branch
          %443 = sbr.rel (%p441) target = $region32
        $region31: #{tpu_custom_call.1} parent=11 // pred_region
          _
        $region32: #{tpu_custom_call.1} parent=11 // pred_fallthru
          _
        // Predicated region
        $region33: #{tpu_custom_call.1} parent=11 // pred_check
          %p444 = pneg %p178
        $region34: #{tpu_custom_call.1} parent=11 // pred_check_branch
          %446 = sbr.rel (%p444) target = $region36
        $region35: #{tpu_custom_call.1} parent=11 // pred_region
          _
        $region36: #{tpu_custom_call.1} parent=11 // pred_fallthru
          _
        // Predicated region
        $region37: #{tpu_custom_call.1} parent=11 // pred_check
          %p447 = pneg %p199
        $region38: #{tpu_custom_call.1} parent=11 // pred_check_branch
          %449 = sbr.rel (%p447) target = $region40
        $region39: #{tpu_custom_call.1} parent=11 // pred_region
          _
        $region40: #{tpu_custom_call.1} parent=11 // pred_fallthru
          _
        // Predicated region
        $region41: #{tpu_custom_call.1} parent=11 // pred_check
          %p450 = pneg %p220
        $region42: #{tpu_custom_call.1} parent=11 // pred_check_branch
          %452 = sbr.rel (%p450) target = $region44
        $region43: #{tpu_custom_call.1} parent=11 // pred_region
          _
        $region44: #{tpu_custom_call.1} parent=11 // pred_fallthru
          _
        // Predicated region
        $region45: #{tpu_custom_call.1} parent=11 // pred_check
          %p453 = pneg %p241
        $region46: #{tpu_custom_call.1} parent=11 // pred_check_branch
          %455 = sbr.rel (%p453) target = $region48
        $region47: #{tpu_custom_call.1} parent=11 // pred_region
          _
        $region48: #{tpu_custom_call.1} parent=11 // pred_fallthru
          _
        // Predicated region
        $region49: #{tpu_custom_call.1} parent=11 // pred_check
          %p456 = pneg %p262
        $region50: #{tpu_custom_call.1} parent=11 // pred_check_branch
          %458 = sbr.rel (%p456) target = $region52
        $region51: #{tpu_custom_call.1} parent=11 // pred_region
          _
        $region52: #{tpu_custom_call.1} parent=11 // pred_fallthru
          _
        // Predicated region
        $region53: #{tpu_custom_call.1} parent=11 // pred_check
          %p459 = pneg %p283
        $region54: #{tpu_custom_call.1} parent=11 // pred_check_branch
          %461 = sbr.rel (%p459) target = $region56
        $region55: #{tpu_custom_call.1} parent=11 // pred_region
          _
        $region56: #{tpu_custom_call.1} parent=11 // pred_fallthru
          _
        // Predicated region
        $region57: #{tpu_custom_call.1} parent=11 // pred_check
          %p462 = pneg %p304
        $region58: #{tpu_custom_call.1} parent=11 // pred_check_branch
          %464 = sbr.rel (%p462) target = $region60
        $region59: #{tpu_custom_call.1} parent=11 // pred_region
          _
        $region60: #{tpu_custom_call.1} parent=11 // pred_fallthru
          _
        // Predicated region
        $region61: #{tpu_custom_call.1} parent=11 // pred_check
          %p465 = pneg %p325
        $region62: #{tpu_custom_call.1} parent=11 // pred_check_branch
          %467 = sbr.rel (%p465) target = $region64
        $region63: #{tpu_custom_call.1} parent=11 // pred_region
          _
        $region64: #{tpu_custom_call.1} parent=11 // pred_fallthru
          _
        // Predicated region
        $region65: #{tpu_custom_call.1} parent=11 // pred_check
          %p468 = pneg %p346
        $region66: #{tpu_custom_call.1} parent=11 // pred_check_branch
          %470 = sbr.rel (%p468) target = $region68
        $region67: #{tpu_custom_call.1} parent=11 // pred_region
          _
        $region68: #{tpu_custom_call.1} parent=11 // pred_fallthru
          _
        // Predicated region
        $region69: #{tpu_custom_call.1} parent=11 // pred_check
          %p471 = pneg %p367
        $region70: #{tpu_custom_call.1} parent=11 // pred_check_branch
          %473 = sbr.rel (%p471) target = $region72
        $region71: #{tpu_custom_call.1} parent=11 // pred_region
          _
        $region72: #{tpu_custom_call.1} parent=11 // pred_fallthru
          _
        // Predicated region
        $region73: #{tpu_custom_call.1} parent=11 // pred_check
          %p474 = pneg %p388
        $region74: #{tpu_custom_call.1} parent=11 // pred_check_branch
          %476 = sbr.rel (%p474) target = $region76
        $region75: #{tpu_custom_call.1} parent=11 // pred_region
          _
        $region76: #{tpu_custom_call.1} parent=11 // pred_fallthru
          _
      $region12: #{tpu_custom_call.1} parent=5 // pred_fallthru
        _
      %p477 = scmp.lt.s32.totalorder %s26, 2
      // Predicated region
      $region77: #{tpu_custom_call.1} parent=5 // pred_check
        %p478 = pneg %p477
      $region78: #{tpu_custom_call.1} parent=5 // pred_check_branch
        %480 = sbr.rel (%p478) target = $region80
      $region79: #{tpu_custom_call.1} parent=5 // pred_region
        // Predicated region
        $region81: #{tpu_custom_call.1} parent=79 // pred_check
          %p481 = pneg %p46
        $region82: #{tpu_custom_call.1} parent=79 // pred_check_branch
          %483 = sbr.rel (%p481) target = $region84
        $region83: #{tpu_custom_call.1} parent=79 // pred_region
          %p484 = scmp.lt.s32.totalorder %s26, 1
          %s485 = scalar_select %p484, %s26, 1
          %s486 = smul.addr %s485, 8
          %s487 = scalar_lea.vmem %s0, %s486
        $region84: #{tpu_custom_call.1} parent=79 // pred_fallthru
          _
      $region80: #{tpu_custom_call.1} parent=5 // pred_fallthru
        _
      %p488 = scmp.le.s32.totalorder 1, %s26
      %p489 = scmp.lt.s32.totalorder %s26, 3
      %p490 = pnand %p488, %p489
      %p491 = pneg %p490
      // Predicated region
      $region85: #{tpu_custom_call.1} parent=5 // pred_check
        _
      $region86: #{tpu_custom_call.1} parent=5 // pred_check_branch
        %493 = sbr.rel (%p490) target = $region88
      $region87: #{tpu_custom_call.1} parent=5 // pred_region
        %s494 = ssub.s32 %s26, 1
        %p495 = scmp.lt.s32.totalorder %s31, 1
        %s496 = scalar_select %p495, %s31, 1
        %s497 = smul.addr %s496, 8
        %s498 = scalar_lea.vmem %s0, %s497
        %p499 = pneg %p52
        %p500 = pneg %p49
        %p501 = pneg %p73
        %p502 = pneg %p70
        %p503 = pneg %p94
        %p504 = pneg %p91
        %p505 = pneg %p115
        %p506 = pneg %p112
        %p507 = pneg %p136
        %p508 = pneg %p133
        %p509 = pneg %p157
        %p510 = pneg %p154
        %p511 = pneg %p178
        %p512 = pneg %p175
        %p513 = pneg %p199
        %p514 = pneg %p196
        %p515 = pneg %p220
        %p516 = pneg %p217
        %p517 = pneg %p241
        %p518 = pneg %p238
        %p519 = pneg %p262
        %p520 = pneg %p259
        %p521 = pneg %p283
        %p522 = pneg %p280
        %p523 = pneg %p304
        %p524 = pneg %p301
        %p525 = pneg %p325
        %p526 = pneg %p322
        %p527 = pneg %p346
        %p528 = pneg %p343
        %p529 = pneg %p367
        %p530 = pneg %p364
        %p531 = pneg %p388
        %p532 = pneg %p385
        %p533 = pneg %p414
        %p534 = pneg %p411
        %s535 = sand.u32 %s401, 1
        %s536 = scalar_lea.sflag [#allocation3], %s535
        %s537 = sand.u32 %s401, 1
        %s538 = smul.addr %s537, 8
        %s539 = scalar_lea.vmem [#allocation2], %s538
        %p540 = scmp.lt.s32.totalorder %s31, 1
        %s541 = scalar_select %p540, %s31, 1
        %s542 = smul.addr %s541, 8
        %s543 = scalar_lea.vmem %s0, %s542
        %v545 = vld [vmem:[%s543] sm:$0xff]
        %v546 = vld [vmem:[%s1] sm:$0xff]
        %v547 = vadd.f32 %v545, %v546
        %v548 = vld [vmem:[%s2] sm:$0x1]
        %v550 = vlaneseq
        %v551 = vshrl.u32 %v550, 7
        %v552 = vsub.s32 0, %v551
        %v553 = vrot.slane %v548, %v552
        %v555 = vadd.f32 %v547, %v553
        %v556 = vld [vmem:[%s3] sm:$0x1]
        %v557 = vld [vmem:[%s4] sm:$0x1]
        %vm558 = vcmask 261120
        %v559 = vsel %vm558, %v555, 0.0
        %560 = vadd.xlane.f32.xlu0 %v559
        %v561 = vpop.xlane.xlu0 %560
        %v562 = vrcp.pop 32.0
        %v563 = vmul.f32 %v561, %v562
        %v564 = vsub.f32 %v555, %v563
        %v565 = vmul.f32 %v564, %v564
        %v566 = vsel %vm558, %v565, 0.0
        %567 = vadd.xlane.f32.xlu0 %v566
        %v568 = vpop.xlane.xlu0 %567
        %v569 = vmul.f32 %v568, %v562
        %v570 = vadd.f32 %v569, 1e-12
        %v571 = vrsqrt.pop %v570
        %v572 = vmul.f32 %v564, %v571
        %v574 = vlaneseq
        %v575 = vshrl.u32 %v574, 7
        %v576 = vsub.s32 0, %v575
        %v577 = vrot.slane %v556, %v576
        %v579 = vmul.f32 %v572, %v577
        %v581 = vlaneseq
        %v582 = vshrl.u32 %v581, 7
        %v583 = vsub.s32 0, %v582
        %v584 = vrot.slane %v557, %v583
        %v586 = vadd.f32 %v579, %v584
        %v587 = vpack.c.bf16 %v586, %v586
        %v588 = vld [vmem:[%s5] sm:$0xf]
        %v589 = vld [vmem:[%s5 + $0x4] sm:$0xf]
        %v590 = vld [vmem:[%s5 + $0x8] sm:$0xf]
        %v591 = vld [vmem:[%s5 + $0xc] sm:$0xf]
        %v592 = vld [vmem:[%s6] sm:$0x1]
        %v594 = vlaneseq
        %v595 = vshrl.u32 %v594, 7
        %v596 = vsub.s32 0, %v595
        %v597 = vrot.slane %v592, %v596
        %v603 = vunpack.c.l.b16 %v588
        %v604 = vunpack.c.l.b16 %v589
        %v605 = vunpack.c.l.b16 %v590
        %v606 = vunpack.c.l.b16 %v591
        %v607 = vpack.c.b16 %v604, %v603
        %v608 = vpack.c.b16 %v606, %v605
        %v612 = vsel %vm558, %v587, 0
        %614 = vmatprep.subr.bf16.mxu0 0
        %615 = vmatpush1.bf16.msra.mxu0 %v607
        %616 = vmatprep.subr.bf16.mxu0 0
        %617 = vmatpush1.bf16.msra.mxu0 %v608
        %618 = vmatprep.subr.bf16.mxu0 0
        %619 = vmatpush1.bf16.msra.mxu0 0
        %620 = vmatprep.subr.bf16.mxu0 0
        %621 = vmatpush1.bf16.msra.mxu0 0
        %622 = vmatprep.subr.bf16.mxu0 0
        %623 = vmatpush1.bf16.msra.mxu0 0
        %624 = vmatprep.subr.bf16.mxu0 0
        %625 = vmatpush1.bf16.msra.mxu0 0
        %626 = vmatprep.subr.bf16.mxu0 0
        %627 = vmatpush1.bf16.msra.mxu0 0
        %628 = vmatprep.subr.bf16.mxu0 0
        %629 = vmatpush1.bf16.msra.mxu0 0
        %630 = vmatprep.subr.bf16.mxu0 0
        %631 = vmatpush1.bf16.msra.mxu0 0
        %632 = vmatprep.subr.bf16.mxu0 0
        %633 = vmatpush1.bf16.msra.mxu0 0
        %634 = vmatprep.subr.bf16.mxu0 0
        %635 = vmatpush1.bf16.msra.mxu0 0
        %636 = vmatprep.subr.bf16.mxu0 0
        %637 = vmatpush1.bf16.msra.mxu0 0
        %638 = vmatprep.subr.bf16.mxu0 0
        %639 = vmatpush1.bf16.msra.mxu0 0
        %640 = vmatprep.subr.bf16.mxu0 0
        %641 = vmatpush1.bf16.msra.mxu0 0
        %642 = vmatprep.subr.bf16.mxu0 0
        %643 = vmatpush1.bf16.msra.mxu0 0
        %644 = vmatprep.subr.bf16.mxu0 0
        %645 = vmatpush1.bf16.msra.mxu0 0
        %646 = vmatprep.mubr.bf16.mxu0 0
        %647 = vmatmul.mubr.bf16.gmra.mrb[0].mxu0 %v612
        %v648 = vpop.f32.mrb[0].mxu0
        %v649 = vadd.f32 %v597, %v648
        %v650 = vpop.f32.mrb[0].mxu0
        %v651 = vpop.f32.mrb[0].mxu0
        %v652 = vpop.f32.mrb[0].mxu0
        %653 = vdwg.mxu0
        %v654 = vpack.c.bf16 %v649, %v649
        %656 = vrot.lane.b32.xlu0 %v654, 112
        %v657 = vpop.permute.xlu0 %656
        %658 = vrot.lane.b32.xlu0 %v654, 96
        %v659 = vpop.permute.xlu0 %658
        %vm660 = vcmask 130048
        %v662 = vsel %vm660, %v654, 0
        %v665 = vsel %vm660, %v659, 0
        %667 = vmatprep.subr.bf16.mxu0 0
        %668 = vmatpush1.bf16.xpose.msra.mxu0 %v665
        %669 = vmatprep.subr.bf16.mxu0 0
        %670 = vmatpush1.bf16.xpose.msra.mxu0 0
        %671 = vmatprep.subr.bf16.mxu0 0
        %672 = vmatpush1.bf16.xpose.msra.mxu0 0
        %673 = vmatprep.subr.bf16.mxu0 0
        %674 = vmatpush1.bf16.xpose.msra.mxu0 0
        %675 = vmatprep.subr.bf16.mxu0 0
        %676 = vmatpush1.bf16.xpose.msra.mxu0 0
        %677 = vmatprep.subr.bf16.mxu0 0
        %678 = vmatpush1.bf16.xpose.msra.mxu0 0
        %679 = vmatprep.subr.bf16.mxu0 0
        %680 = vmatpush1.bf16.xpose.msra.mxu0 0
        %681 = vmatprep.subr.bf16.mxu0 0
        %682 = vmatpush1.bf16.xpose.msra.mxu0 0
        %683 = vmatprep.subr.bf16.mxu0 0
        %684 = vmatpush1.bf16.xpose.msra.mxu0 0
        %685 = vmatprep.subr.bf16.mxu0 0
        %686 = vmatpush1.bf16.xpose.msra.mxu0 0
        %687 = vmatprep.subr.bf16.mxu0 0
        %688 = vmatpush1.bf16.xpose.msra.mxu0 0
        %689 = vmatprep.subr.bf16.mxu0 0
        %690 = vmatpush1.bf16.xpose.msra.mxu0 0
        %691 = vmatprep.subr.bf16.mxu0 0
        %692 = vmatpush1.bf16.xpose.msra.mxu0 0
        %693 = vmatprep.subr.bf16.mxu0 0
        %694 = vmatpush1.bf16.xpose.msra.mxu0 0
        %695 = vmatprep.subr.bf16.mxu0 0
        %696 = vmatpush1.bf16.xpose.msra.mxu0 0
        %697 = vmatprep.subr.bf16.mxu0 0
        %698 = vmatpush1.bf16.xpose.msra.mxu0 0
        %699 = vmatprep.mubr.bf16.mxu0 0
        %700 = vmatmul.mubr.bf16.gmra.mrb[0].mxu0 %v662
        %v701 = vpop.f32.mrb[0].mxu0
        %v702 = vadd.f32 0.0, %v701
        %v703 = vpop.f32.mrb[0].mxu0
        %v704 = vpop.f32.mrb[0].mxu0
        %v705 = vpop.f32.mrb[0].mxu0
        %706 = vdwg.mxu0
        %707 = vrot.lane.b32.xlu0 %v657, 96
        %v708 = vpop.permute.xlu0 %707
        %v710 = vsel %vm660, %v657, 0
        %v713 = vsel %vm660, %v708, 0
        %715 = vmatprep.subr.bf16.mxu0 0
        %716 = vmatpush1.bf16.xpose.msra.mxu0 %v713
        %717 = vmatprep.subr.bf16.mxu0 0
        %718 = vmatpush1.bf16.xpose.msra.mxu0 0
        %719 = vmatprep.subr.bf16.mxu0 0
        %720 = vmatpush1.bf16.xpose.msra.mxu0 0
        %721 = vmatprep.subr.bf16.mxu0 0
        %722 = vmatpush1.bf16.xpose.msra.mxu0 0
        %723 = vmatprep.subr.bf16.mxu0 0
        %724 = vmatpush1.bf16.xpose.msra.mxu0 0
        %725 = vmatprep.subr.bf16.mxu0 0
        %726 = vmatpush1.bf16.xpose.msra.mxu0 0
        %727 = vmatprep.subr.bf16.mxu0 0
        %728 = vmatpush1.bf16.xpose.msra.mxu0 0
        %729 = vmatprep.subr.bf16.mxu0 0
        %730 = vmatpush1.bf16.xpose.msra.mxu0 0
        %731 = vmatprep.subr.bf16.mxu0 0
        %732 = vmatpush1.bf16.xpose.msra.mxu0 0
        %733 = vmatprep.subr.bf16.mxu0 0
        %734 = vmatpush1.bf16.xpose.msra.mxu0 0
        %735 = vmatprep.subr.bf16.mxu0 0
        %736 = vmatpush1.bf16.xpose.msra.mxu0 0
        %737 = vmatprep.subr.bf16.mxu0 0
        %738 = vmatpush1.bf16.xpose.msra.mxu0 0
        %739 = vmatprep.subr.bf16.mxu0 0
        %740 = vmatpush1.bf16.xpose.msra.mxu0 0
        %741 = vmatprep.subr.bf16.mxu0 0
        %742 = vmatpush1.bf16.xpose.msra.mxu0 0
        %743 = vmatprep.subr.bf16.mxu0 0
        %744 = vmatpush1.bf16.xpose.msra.mxu0 0
        %745 = vmatprep.subr.bf16.mxu0 0
        %746 = vmatpush1.bf16.xpose.msra.mxu0 0
        %747 = vmatprep.mubr.bf16.mxu0 0
        %748 = vmatmul.mubr.bf16.gmra.mrb[0].mxu0 %v710
        %v749 = vpop.f32.mrb[0].mxu0
        %v750 = vadd.f32 0.0, %v749
        %v751 = vpop.f32.mrb[0].mxu0
        %v752 = vpop.f32.mrb[0].mxu0
        %v753 = vpop.f32.mrb[0].mxu0
        %754 = vdwg.mxu0
        %vm755 = vcmask 64512
        %v756 = vsel %vm755, %v702, -inf
        %757 = vmax.xlane.f32.xlu0 %v756
        %v758 = vpop.xlane.xlu0 %757
        %v759 = vsel %vm755, %v750, -inf
        %760 = vmax.xlane.f32.xlu0 %v759
        %v761 = vpop.xlane.xlu0 %760
        %v762 = vsub.f32 %v702, %v758
        %v763 = vsub.f32 %v750, %v761
        %v764 = vmul.f32 %v762, 1.442695
        %v765 = vpow.pop %v764
        %v766 = vmul.f32 %v763, 1.442695
        %v767 = vpow.pop %v766
        %v768 = vsel %vm755, %v765, 0.0
        %769 = vadd.xlane.f32.xlu0 %v768
        %v770 = vpop.xlane.xlu0 %769
        %v771 = vsel %vm755, %v767, 0.0
        %772 = vadd.xlane.f32.xlu0 %v771
        %v773 = vpop.xlane.xlu0 %772
        %v774 = vrcp.pop %v770
        %v775 = vmul.f32 %v765, %v774
        %v776 = vrcp.pop %v773
        %v777 = vmul.f32 %v767, %v776
        %v778 = vpack.c.bf16 %v775, %v775
        %v779 = vpack.c.bf16 %v777, %v777
        %780 = vrot.lane.b32.xlu0 %v654, 64
        %v781 = vpop.permute.xlu0 %780
        %v783 = vsel %vm755, %v778, 0
        %vm785 = vcmask 1043456
        %v787 = vsel %vm785, %v781, 0
        %789 = vmatprep.subr.bf16.mxu0 0
        %790 = vmatpush1.bf16.msra.mxu0 %v787
        %791 = vmatprep.subr.bf16.mxu0 0
        %792 = vmatpush1.bf16.msra.mxu0 0
        %793 = vmatprep.subr.bf16.mxu0 0
        %794 = vmatpush1.bf16.msra.mxu0 0
        %795 = vmatprep.subr.bf16.mxu0 0
        %796 = vmatpush1.bf16.msra.mxu0 0
        %797 = vmatprep.subr.bf16.mxu0 0
        %798 = vmatpush1.bf16.msra.mxu0 0
        %799 = vmatprep.subr.bf16.mxu0 0
        %800 = vmatpush1.bf16.msra.mxu0 0
        %801 = vmatprep.subr.bf16.mxu0 0
        %802 = vmatpush1.bf16.msra.mxu0 0
        %803 = vmatprep.subr.bf16.mxu0 0
        %804 = vmatpush1.bf16.msra.mxu0 0
        %805 = vmatprep.subr.bf16.mxu0 0
        %806 = vmatpush1.bf16.msra.mxu0 0
        %807 = vmatprep.subr.bf16.mxu0 0
        %808 = vmatpush1.bf16.msra.mxu0 0
        %809 = vmatprep.subr.bf16.mxu0 0
        %810 = vmatpush1.bf16.msra.mxu0 0
        %811 = vmatprep.subr.bf16.mxu0 0
        %812 = vmatpush1.bf16.msra.mxu0 0
        %813 = vmatprep.subr.bf16.mxu0 0
        %814 = vmatpush1.bf16.msra.mxu0 0
        %815 = vmatprep.subr.bf16.mxu0 0
        %816 = vmatpush1.bf16.msra.mxu0 0
        %817 = vmatprep.subr.bf16.mxu0 0
        %818 = vmatpush1.bf16.msra.mxu0 0
        %819 = vmatprep.subr.bf16.mxu0 0
        %820 = vmatpush1.bf16.msra.mxu0 0
        %821 = vmatprep.mubr.bf16.mxu0 0
        %822 = vmatmul.mubr.bf16.gmra.mrb[0].mxu0 %v783
        %v823 = vpop.f32.mrb[0].mxu0
        %v824 = vadd.f32 0.0, %v823
        %v825 = vpop.f32.mrb[0].mxu0
        %v826 = vpop.f32.mrb[0].mxu0
        %v827 = vpop.f32.mrb[0].mxu0
        %828 = vdwg.mxu0
        %829 = vrot.lane.b32.xlu0 %v657, 64
        %v830 = vpop.permute.xlu0 %829
        %v832 = vsel %vm755, %v779, 0
        %v835 = vsel %vm785, %v830, 0
        %837 = vmatprep.subr.bf16.mxu0 0
        %838 = vmatpush1.bf16.msra.mxu0 %v835
        %839 = vmatprep.subr.bf16.mxu0 0
        %840 = vmatpush1.bf16.msra.mxu0 0
        %841 = vmatprep.subr.bf16.mxu0 0
        %842 = vmatpush1.bf16.msra.mxu0 0
        %843 = vmatprep.subr.bf16.mxu0 0
        %844 = vmatpush1.bf16.msra.mxu0 0
        %845 = vmatprep.subr.bf16.mxu0 0
        %846 = vmatpush1.bf16.msra.mxu0 0
        %847 = vmatprep.subr.bf16.mxu0 0
        %848 = vmatpush1.bf16.msra.mxu0 0
        %849 = vmatprep.subr.bf16.mxu0 0
        %850 = vmatpush1.bf16.msra.mxu0 0
        %851 = vmatprep.subr.bf16.mxu0 0
        %852 = vmatpush1.bf16.msra.mxu0 0
        %853 = vmatprep.subr.bf16.mxu0 0
        %854 = vmatpush1.bf16.msra.mxu0 0
        %855 = vmatprep.subr.bf16.mxu0 0
        %856 = vmatpush1.bf16.msra.mxu0 0
        %857 = vmatprep.subr.bf16.mxu0 0
        %858 = vmatpush1.bf16.msra.mxu0 0
        %859 = vmatprep.subr.bf16.mxu0 0
        %860 = vmatpush1.bf16.msra.mxu0 0
        %861 = vmatprep.subr.bf16.mxu0 0
        %862 = vmatpush1.bf16.msra.mxu0 0
        %863 = vmatprep.subr.bf16.mxu0 0
        %864 = vmatpush1.bf16.msra.mxu0 0
        %865 = vmatprep.subr.bf16.mxu0 0
        %866 = vmatpush1.bf16.msra.mxu0 0
        %867 = vmatprep.subr.bf16.mxu0 0
        %868 = vmatpush1.bf16.msra.mxu0 0
        %869 = vmatprep.mubr.bf16.mxu0 0
        %870 = vmatmul.mubr.bf16.gmra.mrb[0].mxu0 %v832
        %v871 = vpop.f32.mrb[0].mxu0
        %v872 = vadd.f32 0.0, %v871
        %v873 = vpop.f32.mrb[0].mxu0
        %v874 = vpop.f32.mrb[0].mxu0
        %v875 = vpop.f32.mrb[0].mxu0
        %876 = vdwg.mxu0
        %v877 = vpack.c.bf16 %v824, %v824
        %v878 = vpack.c.bf16 %v872, %v872
        %v879 = vld [vmem:[%s7] sm:$0xf]
        %v880 = vld [vmem:[%s7 + $0x4] sm:$0xf]
        %v881 = vld [vmem:[%s7 + $0x8] sm:$0xf]
        %v882 = vld [vmem:[%s7 + $0xc] sm:$0xf]
        %v885 = vunpack.c.l.b16 %v879
        %v886 = vunpack.c.l.b16 %v880
        %v887 = vpack.c.b16 %v886, %v885
        %v890 = vsel %vm660, %v877, 0
        %892 = vmatprep.subr.bf16.mxu0 0
        %893 = vmatpush1.bf16.msra.mxu0 %v887
        %894 = vmatprep.subr.bf16.mxu0 0
        %895 = vmatpush1.bf16.msra.mxu0 0
        %896 = vmatprep.subr.bf16.mxu0 0
        %897 = vmatpush1.bf16.msra.mxu0 0
        %898 = vmatprep.subr.bf16.mxu0 0
        %899 = vmatpush1.bf16.msra.mxu0 0
        %900 = vmatprep.subr.bf16.mxu0 0
        %901 = vmatpush1.bf16.msra.mxu0 0
        %902 = vmatprep.subr.bf16.mxu0 0
        %903 = vmatpush1.bf16.msra.mxu0 0
        %904 = vmatprep.subr.bf16.mxu0 0
        %905 = vmatpush1.bf16.msra.mxu0 0
        %906 = vmatprep.subr.bf16.mxu0 0
        %907 = vmatpush1.bf16.msra.mxu0 0
        %908 = vmatprep.subr.bf16.mxu0 0
        %909 = vmatpush1.bf16.msra.mxu0 0
        %910 = vmatprep.subr.bf16.mxu0 0
        %911 = vmatpush1.bf16.msra.mxu0 0
        %912 = vmatprep.subr.bf16.mxu0 0
        %913 = vmatpush1.bf16.msra.mxu0 0
        %914 = vmatprep.subr.bf16.mxu0 0
        %915 = vmatpush1.bf16.msra.mxu0 0
        %916 = vmatprep.subr.bf16.mxu0 0
        %917 = vmatpush1.bf16.msra.mxu0 0
        %918 = vmatprep.subr.bf16.mxu0 0
        %919 = vmatpush1.bf16.msra.mxu0 0
        %920 = vmatprep.subr.bf16.mxu0 0
        %921 = vmatpush1.bf16.msra.mxu0 0
        %922 = vmatprep.subr.bf16.mxu0 0
        %923 = vmatpush1.bf16.msra.mxu0 0
        %924 = vmatprep.mubr.bf16.mxu0 0
        %925 = vmatmul.mubr.bf16.gmra.mrb[0].mxu0 %v890
        %v926 = vpop.f32.mrb[0].mxu0
        %v927 = vadd.f32 0.0, %v926
        %v928 = vpop.f32.mrb[0].mxu0
        %v929 = vpop.f32.mrb[0].mxu0
        %v930 = vpop.f32.mrb[0].mxu0
        %931 = vdwg.mxu0
        %v934 = vunpack.c.l.b16 %v881
        %v935 = vunpack.c.l.b16 %v882
        %v936 = vpack.c.b16 %v935, %v934
        %v939 = vsel %vm660, %v878, 0
        %941 = vmatprep.subr.bf16.mxu0 0
        %942 = vmatpush1.bf16.msra.mxu0 %v936
        %943 = vmatprep.subr.bf16.mxu0 0
        %944 = vmatpush1.bf16.msra.mxu0 0
        %945 = vmatprep.subr.bf16.mxu0 0
        %946 = vmatpush1.bf16.msra.mxu0 0
        %947 = vmatprep.subr.bf16.mxu0 0
        %948 = vmatpush1.bf16.msra.mxu0 0
        %949 = vmatprep.subr.bf16.mxu0 0
        %950 = vmatpush1.bf16.msra.mxu0 0
        %951 = vmatprep.subr.bf16.mxu0 0
        %952 = vmatpush1.bf16.msra.mxu0 0
        %953 = vmatprep.subr.bf16.mxu0 0
        %954 = vmatpush1.bf16.msra.mxu0 0
        %955 = vmatprep.subr.bf16.mxu0 0
        %956 = vmatpush1.bf16.msra.mxu0 0
        %957 = vmatprep.subr.bf16.mxu0 0
        %958 = vmatpush1.bf16.msra.mxu0 0
        %959 = vmatprep.subr.bf16.mxu0 0
        %960 = vmatpush1.bf16.msra.mxu0 0
        %961 = vmatprep.subr.bf16.mxu0 0
        %962 = vmatpush1.bf16.msra.mxu0 0
        %963 = vmatprep.subr.bf16.mxu0 0
        %964 = vmatpush1.bf16.msra.mxu0 0
        %965 = vmatprep.subr.bf16.mxu0 0
        %966 = vmatpush1.bf16.msra.mxu0 0
        %967 = vmatprep.subr.bf16.mxu0 0
        %968 = vmatpush1.bf16.msra.mxu0 0
        %969 = vmatprep.subr.bf16.mxu0 0
        %970 = vmatpush1.bf16.msra.mxu0 0
        %971 = vmatprep.subr.bf16.mxu0 0
        %972 = vmatpush1.bf16.msra.mxu0 0
        %973 = vmatprep.mubr.bf16.mxu0 0
        %974 = vmatmul.mubr.bf16.gmra.mrb[0].mxu0 %v939
        %v975 = vpop.f32.mrb[0].mxu0
        %v976 = vadd.f32 0.0, %v975
        %v977 = vpop.f32.mrb[0].mxu0
        %v978 = vpop.f32.mrb[0].mxu0
        %v979 = vpop.f32.mrb[0].mxu0
        %980 = vdwg.mxu0
        %v981 = vsel %vm558, %v927, 0.0
        %v982 = vsel %vm558, %v976, 0.0
        %v983 = vadd.f32 %v981, %v982
        %v984 = vld [vmem:[%s8] sm:$0x1]
        %v986 = vlaneseq
        %v987 = vshrl.u32 %v986, 7
        %v988 = vsub.s32 0, %v987
        %v989 = vrot.slane %v984, %v988
        %v991 = vadd.f32 %v983, %v989
        %v992 = vadd.f32 %v586, %v991
        %v993 = vld [vmem:[%s9] sm:$0x1]
        %v994 = vld [vmem:[%s10] sm:$0x1]
        %v995 = vsel %vm558, %v992, 0.0
        %996 = vadd.xlane.f32.xlu0 %v995
        %v997 = vpop.xlane.xlu0 %996
        %v998 = vmul.f32 %v997, %v562
        %v999 = vsub.f32 %v992, %v998
        %v1000 = vmul.f32 %v999, %v999
        %v1001 = vsel %vm558, %v1000, 0.0
        %1002 = vadd.xlane.f32.xlu0 %v1001
        %v1003 = vpop.xlane.xlu0 %1002
        %v1004 = vmul.f32 %v1003, %v562
        %v1005 = vadd.f32 %v1004, 1e-12
        %v1006 = vrsqrt.pop %v1005
        %v1007 = vmul.f32 %v999, %v1006
        %v1009 = vlaneseq
        %v1010 = vshrl.u32 %v1009, 7
        %v1011 = vsub.s32 0, %v1010
        %v1012 = vrot.slane %v993, %v1011
        %v1014 = vmul.f32 %v1007, %v1012
        %v1016 = vlaneseq
        %v1017 = vshrl.u32 %v1016, 7
        %v1018 = vsub.s32 0, %v1017
        %v1019 = vrot.slane %v994, %v1018
        %v1021 = vadd.f32 %v1014, %v1019
        %v1022 = vpack.c.bf16 %v1021, %v1021
        %v1023 = vld [vmem:[%s11] sm:$0xf]
        %v1024 = vld [vmem:[%s11 + $0x4] sm:$0xf]
        %v1025 = vld [vmem:[%s11 + $0x8] sm:$0xf]
        %v1026 = vld [vmem:[%s11 + $0xc] sm:$0xf]
        %v1027 = vld [vmem:[%s12] sm:$0x1]
        %v1029 = vlaneseq
        %v1030 = vshrl.u32 %v1029, 7
        %v1031 = vsub.s32 0, %v1030
        %v1032 = vrot.slane %v1027, %v1031
        %v1038 = vunpack.c.l.b16 %v1023
        %v1039 = vunpack.c.l.b16 %v1024
        %v1040 = vunpack.c.l.b16 %v1025
        %v1041 = vunpack.c.l.b16 %v1026
        %v1042 = vpack.c.b16 %v1039, %v1038
        %v1043 = vpack.c.b16 %v1041, %v1040
        %v1047 = vsel %vm558, %v1022, 0
        %1049 = vmatprep.subr.bf16.mxu0 0
        %1050 = vmatpush1.bf16.msra.mxu0 %v1042
        %1051 = vmatprep.subr.bf16.mxu0 0
        %1052 = vmatpush1.bf16.msra.mxu0 %v1043
        %1053 = vmatprep.subr.bf16.mxu0 0
        %1054 = vmatpush1.bf16.msra.mxu0 0
        %1055 = vmatprep.subr.bf16.mxu0 0
        %1056 = vmatpush1.bf16.msra.mxu0 0
        %1057 = vmatprep.subr.bf16.mxu0 0
        %1058 = vmatpush1.bf16.msra.mxu0 0
        %1059 = vmatprep.subr.bf16.mxu0 0
        %1060 = vmatpush1.bf16.msra.mxu0 0
        %1061 = vmatprep.subr.bf16.mxu0 0
        %1062 = vmatpush1.bf16.msra.mxu0 0
        %1063 = vmatprep.subr.bf16.mxu0 0
        %1064 = vmatpush1.bf16.msra.mxu0 0
        %1065 = vmatprep.subr.bf16.mxu0 0
        %1066 = vmatpush1.bf16.msra.mxu0 0
        %1067 = vmatprep.subr.bf16.mxu0 0
        %1068 = vmatpush1.bf16.msra.mxu0 0
        %1069 = vmatprep.subr.bf16.mxu0 0
        %1070 = vmatpush1.bf16.msra.mxu0 0
        %1071 = vmatprep.subr.bf16.mxu0 0
        %1072 = vmatpush1.bf16.msra.mxu0 0
        %1073 = vmatprep.subr.bf16.mxu0 0
        %1074 = vmatpush1.bf16.msra.mxu0 0
        %1075 = vmatprep.subr.bf16.mxu0 0
        %1076 = vmatpush1.bf16.msra.mxu0 0
        %1077 = vmatprep.subr.bf16.mxu0 0
        %1078 = vmatpush1.bf16.msra.mxu0 0
        %1079 = vmatprep.subr.bf16.mxu0 0
        %1080 = vmatpush1.bf16.msra.mxu0 0
        %1081 = vmatprep.mubr.bf16.mxu0 0
        %1082 = vmatmul.mubr.bf16.gmra.mrb[0].mxu0 %v1047
        %v1083 = vpop.f32.mrb[0].mxu0
        %v1084 = vadd.f32 %v1032, %v1083
        %v1085 = vpop.f32.mrb[0].mxu0
        %v1086 = vpop.f32.mrb[0].mxu0
        %v1087 = vpop.f32.mrb[0].mxu0
        %1088 = vdwg.mxu0
        %v1089 = vmul.f32 %v1084, %v1084
        %v1090 = vmul.f32 %v1084, %v1089
        %v1091 = vmul.f32 %v1090, 0.044715
        %v1092 = vadd.f32 %v1084, %v1091
        %v1093 = vmul.f32 %v1092, 0.7978846
        %v1094 = vtanh.pop %v1093
        %v1095 = vadd.f32 %v1094, 1.0
        %v1096 = vmul.f32 %v1095, 0.5
        %v1097 = vmul.f32 %v1084, %v1096
        %v1098 = vpack.c.bf16 %v1097, %v1097
        %v1099 = vld [vmem:[%s13] sm:$0xf]
        %v1100 = vld [vmem:[%s13 + $0x4] sm:$0xf]
        %v1101 = vld [vmem:[%s13 + $0x8] sm:$0xf]
        %v1102 = vld [vmem:[%s13 + $0xc] sm:$0xf]
        %v1103 = vld [vmem:[%s13 + $0x10] sm:$0xf]
        %v1104 = vld [vmem:[%s13 + $0x14] sm:$0xf]
        %v1105 = vld [vmem:[%s13 + $0x18] sm:$0xf]
        %v1106 = vld [vmem:[%s13 + $0x1c] sm:$0xf]
        %v1107 = vld [vmem:[%s13 + $0x20] sm:$0xf]
        %v1108 = vld [vmem:[%s13 + $0x24] sm:$0xf]
        %v1109 = vld [vmem:[%s13 + $0x28] sm:$0xf]
        %v1110 = vld [vmem:[%s13 + $0x2c] sm:$0xf]
        %v1111 = vld [vmem:[%s13 + $0x30] sm:$0xf]
        %v1112 = vld [vmem:[%s13 + $0x34] sm:$0xf]
        %v1113 = vld [vmem:[%s13 + $0x38] sm:$0xf]
        %v1114 = vld [vmem:[%s13 + $0x3c] sm:$0xf]
        %v1115 = vld [vmem:[%s14] sm:$0x1]
        %v1117 = vlaneseq
        %v1118 = vshrl.u32 %v1117, 7
        %v1119 = vsub.s32 0, %v1118
        %v1120 = vrot.slane %v1115, %v1119
        %v1138 = vunpack.c.l.b16 %v1099
        %v1139 = vunpack.c.l.b16 %v1100
        %v1140 = vunpack.c.l.b16 %v1101
        %v1141 = vunpack.c.l.b16 %v1102
        %v1142 = vunpack.c.l.b16 %v1103
        %v1143 = vunpack.c.l.b16 %v1104
        %v1144 = vunpack.c.l.b16 %v1105
        %v1145 = vunpack.c.l.b16 %v1106
        %v1146 = vunpack.c.l.b16 %v1107
        %v1147 = vunpack.c.l.b16 %v1108
        %v1148 = vunpack.c.l.b16 %v1109
        %v1149 = vunpack.c.l.b16 %v1110
        %v1150 = vunpack.c.l.b16 %v1111
        %v1151 = vunpack.c.l.b16 %v1112
        %v1152 = vunpack.c.l.b16 %v1113
        %v1153 = vunpack.c.l.b16 %v1114
        %v1154 = vpack.c.b16 %v1139, %v1138
        %v1155 = vpack.c.b16 %v1141, %v1140
        %v1156 = vpack.c.b16 %v1143, %v1142
        %v1157 = vpack.c.b16 %v1145, %v1144
        %v1158 = vpack.c.b16 %v1147, %v1146
        %v1159 = vpack.c.b16 %v1149, %v1148
        %v1160 = vpack.c.b16 %v1151, %v1150
        %v1161 = vpack.c.b16 %v1153, %v1152
        %1170 = vmatprep.subr.bf16.mxu0 0
        %1171 = vmatpush1.bf16.msra.mxu0 %v1154
        %1172 = vmatprep.subr.bf16.mxu0 0
        %1173 = vmatpush1.bf16.msra.mxu0 %v1155
        %1174 = vmatprep.subr.bf16.mxu0 0
        %1175 = vmatpush1.bf16.msra.mxu0 %v1156
        %1176 = vmatprep.subr.bf16.mxu0 0
        %1177 = vmatpush1.bf16.msra.mxu0 %v1157
        %1178 = vmatprep.subr.bf16.mxu0 0
        %1179 = vmatpush1.bf16.msra.mxu0 %v1158
        %1180 = vmatprep.subr.bf16.mxu0 0
        %1181 = vmatpush1.bf16.msra.mxu0 %v1159
        %1182 = vmatprep.subr.bf16.mxu0 0
        %1183 = vmatpush1.bf16.msra.mxu0 %v1160
        %1184 = vmatprep.subr.bf16.mxu0 0
        %1185 = vmatpush1.bf16.msra.mxu0 %v1161
        %1186 = vmatprep.subr.bf16.mxu0 0
        %1187 = vmatpush1.bf16.msra.mxu0 0
        %1188 = vmatprep.subr.bf16.mxu0 0
        %1189 = vmatpush1.bf16.msra.mxu0 0
        %1190 = vmatprep.subr.bf16.mxu0 0
        %1191 = vmatpush1.bf16.msra.mxu0 0
        %1192 = vmatprep.subr.bf16.mxu0 0
        %1193 = vmatpush1.bf16.msra.mxu0 0
        %1194 = vmatprep.subr.bf16.mxu0 0
        %1195 = vmatpush1.bf16.msra.mxu0 0
        %1196 = vmatprep.subr.bf16.mxu0 0
        %1197 = vmatpush1.bf16.msra.mxu0 0
        %1198 = vmatprep.subr.bf16.mxu0 0
        %1199 = vmatpush1.bf16.msra.mxu0 0
        %1200 = vmatprep.subr.bf16.mxu0 0
        %1201 = vmatpush1.bf16.msra.mxu0 0
        %1202 = vmatprep.mubr.bf16.mxu0 0
        %1203 = vmatmul.mubr.bf16.gmra.mrb[0].mxu0 %v1098
        %v1204 = vpop.f32.mrb[0].mxu0
        %v1205 = vadd.f32 %v1120, %v1204
        %v1206 = vpop.f32.mrb[0].mxu0
        %v1207 = vpop.f32.mrb[0].mxu0
        %v1208 = vpop.f32.mrb[0].mxu0
        %1209 = vdwg.mxu0
        %v1210 = vadd.f32 %v1021, %v1205
        %v1211 = vld [vmem:[%s15] sm:$0x1]
        %v1212 = vld [vmem:[%s16] sm:$0x1]
        %v1213 = vsel %vm558, %v1210, 0.0
        %1214 = vadd.xlane.f32.xlu0 %v1213
        %v1215 = vpop.xlane.xlu0 %1214
        %v1216 = vmul.f32 %v1215, %v562
        %v1217 = vsub.f32 %v1210, %v1216
        %v1218 = vmul.f32 %v1217, %v1217
        %v1219 = vsel %vm558, %v1218, 0.0
        %1220 = vadd.xlane.f32.xlu0 %v1219
        %v1221 = vpop.xlane.xlu0 %1220
        %v1222 = vmul.f32 %v1221, %v562
        %v1223 = vadd.f32 %v1222, 1e-12
        %v1224 = vrsqrt.pop %v1223
        %v1225 = vmul.f32 %v1217, %v1224
        %v1227 = vlaneseq
        %v1228 = vshrl.u32 %v1227, 7
        %v1229 = vsub.s32 0, %v1228
        %v1230 = vrot.slane %v1211, %v1229
        %v1232 = vmul.f32 %v1225, %v1230
        %v1234 = vlaneseq
        %v1235 = vshrl.u32 %v1234, 7
        %v1236 = vsub.s32 0, %v1235
        %v1237 = vrot.slane %v1212, %v1236
        %v1239 = vadd.f32 %v1232, %v1237
        %v1240 = vpack.c.bf16 %v1239, %v1239
        %s1241 = scalar_lea.vmem %s5, 16
        %v1242 = vld [vmem:[%s1241] sm:$0xf]
        %v1243 = vld [vmem:[%s1241 + $0x4] sm:$0xf]
        %v1244 = vld [vmem:[%s1241 + $0x8] sm:$0xf]
        %v1245 = vld [vmem:[%s1241 + $0xc] sm:$0xf]
        %s1246 = scalar_lea.vmem %s6, 1
        %v1247 = vld [vmem:[%s1246] sm:$0x1]
        %v1249 = vlaneseq
        %v1250 = vshrl.u32 %v1249, 7
        %v1251 = vsub.s32 0, %v1250
        %v1252 = vrot.slane %v1247, %v1251
        %v1258 = vunpack.c.l.b16 %v1242
        %v1259 = vunpack.c.l.b16 %v1243
        %v1260 = vunpack.c.l.b16 %v1244
        %v1261 = vunpack.c.l.b16 %v1245
        %v1262 = vpack.c.b16 %v1259, %v1258
        %v1263 = vpack.c.b16 %v1261, %v1260
        %v1267 = vsel %vm558, %v1240, 0
        %1269 = vmatprep.subr.bf16.mxu0 0
        %1270 = vmatpush1.bf16.msra.mxu0 %v1262
        %1271 = vmatprep.subr.bf16.mxu0 0
        %1272 = vmatpush1.bf16.msra.mxu0 %v1263
        %1273 = vmatprep.subr.bf16.mxu0 0
        %1274 = vmatpush1.bf16.msra.mxu0 0
        %1275 = vmatprep.subr.bf16.mxu0 0
        %1276 = vmatpush1.bf16.msra.mxu0 0
        %1277 = vmatprep.subr.bf16.mxu0 0
        %1278 = vmatpush1.bf16.msra.mxu0 0
        %1279 = vmatprep.subr.bf16.mxu0 0
        %1280 = vmatpush1.bf16.msra.mxu0 0
        %1281 = vmatprep.subr.bf16.mxu0 0
        %1282 = vmatpush1.bf16.msra.mxu0 0
        %1283 = vmatprep.subr.bf16.mxu0 0
        %1284 = vmatpush1.bf16.msra.mxu0 0
        %1285 = vmatprep.subr.bf16.mxu0 0
        %1286 = vmatpush1.bf16.msra.mxu0 0
        %1287 = vmatprep.subr.bf16.mxu0 0
        %1288 = vmatpush1.bf16.msra.mxu0 0
        %1289 = vmatprep.subr.bf16.mxu0 0
        %1290 = vmatpush1.bf16.msra.mxu0 0
        %1291 = vmatprep.subr.bf16.mxu0 0
        %1292 = vmatpush1.bf16.msra.mxu0 0
        %1293 = vmatprep.subr.bf16.mxu0 0
        %1294 = vmatpush1.bf16.msra.mxu0 0
        %1295 = vmatprep.subr.bf16.mxu0 0
        %1296 = vmatpush1.bf16.msra.mxu0 0
        %1297 = vmatprep.subr.bf16.mxu0 0
        %1298 = vmatpush1.bf16.msra.mxu0 0
        %1299 = vmatprep.subr.bf16.mxu0 0
        %1300 = vmatpush1.bf16.msra.mxu0 0
        %1301 = vmatprep.mubr.bf16.mxu0 0
        %1302 = vmatmul.mubr.bf16.gmra.mrb[0].mxu0 %v1267
        %v1303 = vpop.f32.mrb[0].mxu0
        %v1304 = vadd.f32 %v1252, %v1303
        %v1305 = vpop.f32.mrb[0].mxu0
        %v1306 = vpop.f32.mrb[0].mxu0
        %v1307 = vpop.f32.mrb[0].mxu0
        %1308 = vdwg.mxu0
        %v1309 = vpack.c.bf16 %v1304, %v1304
        %1311 = vrot.lane.b32.xlu0 %v1309, 112
        %v1312 = vpop.permute.xlu0 %1311
        %1313 = vrot.lane.b32.xlu0 %v1309, 96
        %v1314 = vpop.permute.xlu0 %1313
        %v1316 = vsel %vm660, %v1309, 0
        %v1319 = vsel %vm660, %v1314, 0
        %1321 = vmatprep.subr.bf16.mxu0 0
        %1322 = vmatpush1.bf16.xpose.msra.mxu0 %v1319
        %1323 = vmatprep.subr.bf16.mxu0 0
        %1324 = vmatpush1.bf16.xpose.msra.mxu0 0
        %1325 = vmatprep.subr.bf16.mxu0 0
        %1326 = vmatpush1.bf16.xpose.msra.mxu0 0
        %1327 = vmatprep.subr.bf16.mxu0 0
        %1328 = vmatpush1.bf16.xpose.msra.mxu0 0
        %1329 = vmatprep.subr.bf16.mxu0 0
        %1330 = vmatpush1.bf16.xpose.msra.mxu0 0
        %1331 = vmatprep.subr.bf16.mxu0 0
        %1332 = vmatpush1.bf16.xpose.msra.mxu0 0
        %1333 = vmatprep.subr.bf16.mxu0 0
        %1334 = vmatpush1.bf16.xpose.msra.mxu0 0
        %1335 = vmatprep.subr.bf16.mxu0 0
        %1336 = vmatpush1.bf16.xpose.msra.mxu0 0
        %1337 = vmatprep.subr.bf16.mxu0 0
        %1338 = vmatpush1.bf16.xpose.msra.mxu0 0
        %1339 = vmatprep.subr.bf16.mxu0 0
        %1340 = vmatpush1.bf16.xpose.msra.mxu0 0
        %1341 = vmatprep.subr.bf16.mxu0 0
        %1342 = vmatpush1.bf16.xpose.msra.mxu0 0
        %1343 = vmatprep.subr.bf16.mxu0 0
        %1344 = vmatpush1.bf16.xpose.msra.mxu0 0
        %1345 = vmatprep.subr.bf16.mxu0 0
        %1346 = vmatpush1.bf16.xpose.msra.mxu0 0
        %1347 = vmatprep.subr.bf16.mxu0 0
        %1348 = vmatpush1.bf16.xpose.msra.mxu0 0
        %1349 = vmatprep.subr.bf16.mxu0 0
        %1350 = vmatpush1.bf16.xpose.msra.mxu0 0
        %1351 = vmatprep.subr.bf16.mxu0 0
        %1352 = vmatpush1.bf16.xpose.msra.mxu0 0
        %1353 = vmatprep.mubr.bf16.mxu0 0
        %1354 = vmatmul.mubr.bf16.gmra.mrb[0].mxu0 %v1316
        %v1355 = vpop.f32.mrb[0].mxu0
        %v1356 = vadd.f32 0.0, %v1355
        %v1357 = vpop.f32.mrb[0].mxu0
        %v1358 = vpop.f32.mrb[0].mxu0
        %v1359 = vpop.f32.mrb[0].mxu0
        %1360 = vdwg.mxu0
        %1361 = vrot.lane.b32.xlu0 %v1312, 96
        %v1362 = vpop.permute.xlu0 %1361
        %v1364 = vsel %vm660, %v1312, 0
        %v1367 = vsel %vm660, %v1362, 0
        %1369 = vmatprep.subr.bf16.mxu0 0
        %1370 = vmatpush1.bf16.xpose.msra.mxu0 %v1367
        %1371 = vmatprep.subr.bf16.mxu0 0
        %1372 = vmatpush1.bf16.xpose.msra.mxu0 0
        %1373 = vmatprep.subr.bf16.mxu0 0
        %1374 = vmatpush1.bf16.xpose.msra.mxu0 0
        %1375 = vmatprep.subr.bf16.mxu0 0
        %1376 = vmatpush1.bf16.xpose.msra.mxu0 0
        %1377 = vmatprep.subr.bf16.mxu0 0
        %1378 = vmatpush1.bf16.xpose.msra.mxu0 0
        %1379 = vmatprep.subr.bf16.mxu0 0
        %1380 = vmatpush1.bf16.xpose.msra.mxu0 0
        %1381 = vmatprep.subr.bf16.mxu0 0
        %1382 = vmatpush1.bf16.xpose.msra.mxu0 0
        %1383 = vmatprep.subr.bf16.mxu0 0
        %1384 = vmatpush1.bf16.xpose.msra.mxu0 0
        %1385 = vmatprep.subr.bf16.mxu0 0
        %1386 = vmatpush1.bf16.xpose.msra.mxu0 0
        %1387 = vmatprep.subr.bf16.mxu0 0
        %1388 = vmatpush1.bf16.xpose.msra.mxu0 0
        %1389 = vmatprep.subr.bf16.mxu0 0
        %1390 = vmatpush1.bf16.xpose.msra.mxu0 0
        %1391 = vmatprep.subr.bf16.mxu0 0
        %1392 = vmatpush1.bf16.xpose.msra.mxu0 0
        %1393 = vmatprep.subr.bf16.mxu0 0
        %1394 = vmatpush1.bf16.xpose.msra.mxu0 0
        %1395 = vmatprep.subr.bf16.mxu0 0
        %1396 = vmatpush1.bf16.xpose.msra.mxu0 0
        %1397 = vmatprep.subr.bf16.mxu0 0
        %1398 = vmatpush1.bf16.xpose.msra.mxu0 0
        %1399 = vmatprep.subr.bf16.mxu0 0
        %1400 = vmatpush1.bf16.xpose.msra.mxu0 0
        %1401 = vmatprep.mubr.bf16.mxu0 0
        %1402 = vmatmul.mubr.bf16.gmra.mrb[0].mxu0 %v1364
        %v1403 = vpop.f32.mrb[0].mxu0
        %v1404 = vadd.f32 0.0, %v1403
        %v1405 = vpop.f32.mrb[0].mxu0
        %v1406 = vpop.f32.mrb[0].mxu0
        %v1407 = vpop.f32.mrb[0].mxu0
        %1408 = vdwg.mxu0
        %v1409 = vsel %vm755, %v1356, -inf
        %1410 = vmax.xlane.f32.xlu0 %v1409
        %v1411 = vpop.xlane.xlu0 %1410
        %v1412 = vsel %vm755, %v1404, -inf
        %1413 = vmax.xlane.f32.xlu0 %v1412
        %v1414 = vpop.xlane.xlu0 %1413
        %v1415 = vsub.f32 %v1356, %v1411
        %v1416 = vsub.f32 %v1404, %v1414
        %v1417 = vmul.f32 %v1415, 1.442695
        %v1418 = vpow.pop %v1417
        %v1419 = vmul.f32 %v1416, 1.442695
        %v1420 = vpow.pop %v1419
        %v1421 = vsel %vm755, %v1418, 0.0
        %1422 = vadd.xlane.f32.xlu0 %v1421
        %v1423 = vpop.xlane.xlu0 %1422
        %v1424 = vsel %vm755, %v1420, 0.0
        %1425 = vadd.xlane.f32.xlu0 %v1424
        %v1426 = vpop.xlane.xlu0 %1425
        %v1427 = vrcp.pop %v1423
        %v1428 = vmul.f32 %v1418, %v1427
        %v1429 = vrcp.pop %v1426
        %v1430 = vmul.f32 %v1420, %v1429
        %v1431 = vpack.c.bf16 %v1428, %v1428
        %v1432 = vpack.c.bf16 %v1430, %v1430
        %1433 = vrot.lane.b32.xlu0 %v1309, 64
        %v1434 = vpop.permute.xlu0 %1433
        %v1436 = vsel %vm755, %v1431, 0
        %v1439 = vsel %vm785, %v1434, 0
        %1441 = vmatprep.subr.bf16.mxu0 0
        %1442 = vmatpush1.bf16.msra.mxu0 %v1439
        %1443 = vmatprep.subr.bf16.mxu0 0
        %1444 = vmatpush1.bf16.msra.mxu0 0
        %1445 = vmatprep.subr.bf16.mxu0 0
        %1446 = vmatpush1.bf16.msra.mxu0 0
        %1447 = vmatprep.subr.bf16.mxu0 0
        %1448 = vmatpush1.bf16.msra.mxu0 0
        %1449 = vmatprep.subr.bf16.mxu0 0
        %1450 = vmatpush1.bf16.msra.mxu0 0
        %1451 = vmatprep.subr.bf16.mxu0 0
        %1452 = vmatpush1.bf16.msra.mxu0 0
        %1453 = vmatprep.subr.bf16.mxu0 0
        %1454 = vmatpush1.bf16.msra.mxu0 0
        %1455 = vmatprep.subr.bf16.mxu0 0
        %1456 = vmatpush1.bf16.msra.mxu0 0
        %1457 = vmatprep.subr.bf16.mxu0 0
        %1458 = vmatpush1.bf16.msra.mxu0 0
        %1459 = vmatprep.subr.bf16.mxu0 0
        %1460 = vmatpush1.bf16.msra.mxu0 0
        %1461 = vmatprep.subr.bf16.mxu0 0
        %1462 = vmatpush1.bf16.msra.mxu0 0
        %1463 = vmatprep.subr.bf16.mxu0 0
        %1464 = vmatpush1.bf16.msra.mxu0 0
        %1465 = vmatprep.subr.bf16.mxu0 0
        %1466 = vmatpush1.bf16.msra.mxu0 0
        %1467 = vmatprep.subr.bf16.mxu0 0
        %1468 = vmatpush1.bf16.msra.mxu0 0
        %1469 = vmatprep.subr.bf16.mxu0 0
        %1470 = vmatpush1.bf16.msra.mxu0 0
        %1471 = vmatprep.subr.bf16.mxu0 0
        %1472 = vmatpush1.bf16.msra.mxu0 0
        %1473 = vmatprep.mubr.bf16.mxu0 0
        %1474 = vmatmul.mubr.bf16.gmra.mrb[0].mxu0 %v1436
        %v1475 = vpop.f32.mrb[0].mxu0
        %v1476 = vadd.f32 0.0, %v1475
        %v1477 = vpop.f32.mrb[0].mxu0
        %v1478 = vpop.f32.mrb[0].mxu0
        %v1479 = vpop.f32.mrb[0].mxu0
        %1480 = vdwg.mxu0
        %1481 = vrot.lane.b32.xlu0 %v1312, 64
        %v1482 = vpop.permute.xlu0 %1481
        %v1484 = vsel %vm755, %v1432, 0
        %v1487 = vsel %vm785, %v1482, 0
        %1489 = vmatprep.subr.bf16.mxu0 0
        %1490 = vmatpush1.bf16.msra.mxu0 %v1487
        %1491 = vmatprep.subr.bf16.mxu0 0
        %1492 = vmatpush1.bf16.msra.mxu0 0
        %1493 = vmatprep.subr.bf16.mxu0 0
        %1494 = vmatpush1.bf16.msra.mxu0 0
        %1495 = vmatprep.subr.bf16.mxu0 0
        %1496 = vmatpush1.bf16.msra.mxu0 0
        %1497 = vmatprep.subr.bf16.mxu0 0
        %1498 = vmatpush1.bf16.msra.mxu0 0
        %1499 = vmatprep.subr.bf16.mxu0 0
        %1500 = vmatpush1.bf16.msra.mxu0 0
        %1501 = vmatprep.subr.bf16.mxu0 0
        %1502 = vmatpush1.bf16.msra.mxu0 0
        %1503 = vmatprep.subr.bf16.mxu0 0
        %1504 = vmatpush1.bf16.msra.mxu0 0
        %1505 = vmatprep.subr.bf16.mxu0 0
        %1506 = vmatpush1.bf16.msra.mxu0 0
        %1507 = vmatprep.subr.bf16.mxu0 0
        %1508 = vmatpush1.bf16.msra.mxu0 0
        %1509 = vmatprep.subr.bf16.mxu0 0
        %1510 = vmatpush1.bf16.msra.mxu0 0
        %1511 = vmatprep.subr.bf16.mxu0 0
        %1512 = vmatpush1.bf16.msra.mxu0 0
        %1513 = vmatprep.subr.bf16.mxu0 0
        %1514 = vmatpush1.bf16.msra.mxu0 0
        %1515 = vmatprep.subr.bf16.mxu0 0
        %1516 = vmatpush1.bf16.msra.mxu0 0
        %1517 = vmatprep.subr.bf16.mxu0 0
        %1518 = vmatpush1.bf16.msra.mxu0 0
        %1519 = vmatprep.subr.bf16.mxu0 0
        %1520 = vmatpush1.bf16.msra.mxu0 0
        %1521 = vmatprep.mubr.bf16.mxu0 0
        %1522 = vmatmul.mubr.bf16.gmra.mrb[0].mxu0 %v1484
        %v1523 = vpop.f32.mrb[0].mxu0
        %v1524 = vadd.f32 0.0, %v1523
        %v1525 = vpop.f32.mrb[0].mxu0
        %v1526 = vpop.f32.mrb[0].mxu0
        %v1527 = vpop.f32.mrb[0].mxu0
        %1528 = vdwg.mxu0
        %v1529 = vpack.c.bf16 %v1476, %v1476
        %v1530 = vpack.c.bf16 %v1524, %v1524
        %s1531 = scalar_lea.vmem %s7, 16
        %v1532 = vld [vmem:[%s1531] sm:$0xf]
        %v1533 = vld [vmem:[%s1531 + $0x4] sm:$0xf]
        %v1534 = vld [vmem:[%s1531 + $0x8] sm:$0xf]
        %v1535 = vld [vmem:[%s1531 + $0xc] sm:$0xf]
        %v1538 = vunpack.c.l.b16 %v1532
        %v1539 = vunpack.c.l.b16 %v1533
        %v1540 = vpack.c.b16 %v1539, %v1538
        %v1543 = vsel %vm660, %v1529, 0
        %1545 = vmatprep.subr.bf16.mxu0 0
        %1546 = vmatpush1.bf16.msra.mxu0 %v1540
        %1547 = vmatprep.subr.bf16.mxu0 0
        %1548 = vmatpush1.bf16.msra.mxu0 0
        %1549 = vmatprep.subr.bf16.mxu0 0
        %1550 = vmatpush1.bf16.msra.mxu0 0
        %1551 = vmatprep.subr.bf16.mxu0 0
        %1552 = vmatpush1.bf16.msra.mxu0 0
        %1553 = vmatprep.subr.bf16.mxu0 0
        %1554 = vmatpush1.bf16.msra.mxu0 0
        %1555 = vmatprep.subr.bf16.mxu0 0
        %1556 = vmatpush1.bf16.msra.mxu0 0
        %1557 = vmatprep.subr.bf16.mxu0 0
        %1558 = vmatpush1.bf16.msra.mxu0 0
        %1559 = vmatprep.subr.bf16.mxu0 0
        %1560 = vmatpush1.bf16.msra.mxu0 0
        %1561 = vmatprep.subr.bf16.mxu0 0
        %1562 = vmatpush1.bf16.msra.mxu0 0
        %1563 = vmatprep.subr.bf16.mxu0 0
        %1564 = vmatpush1.bf16.msra.mxu0 0
        %1565 = vmatprep.subr.bf16.mxu0 0
        %1566 = vmatpush1.bf16.msra.mxu0 0
        %1567 = vmatprep.subr.bf16.mxu0 0
        %1568 = vmatpush1.bf16.msra.mxu0 0
        %1569 = vmatprep.subr.bf16.mxu0 0
        %1570 = vmatpush1.bf16.msra.mxu0 0
        %1571 = vmatprep.subr.bf16.mxu0 0
        %1572 = vmatpush1.bf16.msra.mxu0 0
        %1573 = vmatprep.subr.bf16.mxu0 0
        %1574 = vmatpush1.bf16.msra.mxu0 0
        %1575 = vmatprep.subr.bf16.mxu0 0
        %1576 = vmatpush1.bf16.msra.mxu0 0
        %1577 = vmatprep.mubr.bf16.mxu0 0
        %1578 = vmatmul.mubr.bf16.gmra.mrb[0].mxu0 %v1543
        %v1579 = vpop.f32.mrb[0].mxu0
        %v1580 = vadd.f32 0.0, %v1579
        %v1581 = vpop.f32.mrb[0].mxu0
        %v1582 = vpop.f32.mrb[0].mxu0
        %v1583 = vpop.f32.mrb[0].mxu0
        %1584 = vdwg.mxu0
        %v1587 = vunpack.c.l.b16 %v1534
        %v1588 = vunpack.c.l.b16 %v1535
        %v1589 = vpack.c.b16 %v1588, %v1587
        %v1592 = vsel %vm660, %v1530, 0
        %1594 = vmatprep.subr.bf16.mxu0 0
        %1595 = vmatpush1.bf16.msra.mxu0 %v1589
        %1596 = vmatprep.subr.bf16.mxu0 0
        %1597 = vmatpush1.bf16.msra.mxu0 0
        %1598 = vmatprep.subr.bf16.mxu0 0
        %1599 = vmatpush1.bf16.msra.mxu0 0
        %1600 = vmatprep.subr.bf16.mxu0 0
        %1601 = vmatpush1.bf16.msra.mxu0 0
        %1602 = vmatprep.subr.bf16.mxu0 0
        %1603 = vmatpush1.bf16.msra.mxu0 0
        %1604 = vmatprep.subr.bf16.mxu0 0
        %1605 = vmatpush1.bf16.msra.mxu0 0
        %1606 = vmatprep.subr.bf16.mxu0 0
        %1607 = vmatpush1.bf16.msra.mxu0 0
        %1608 = vmatprep.subr.bf16.mxu0 0
        %1609 = vmatpush1.bf16.msra.mxu0 0
        %1610 = vmatprep.subr.bf16.mxu0 0
        %1611 = vmatpush1.bf16.msra.mxu0 0
        %1612 = vmatprep.subr.bf16.mxu0 0
        %1613 = vmatpush1.bf16.msra.mxu0 0
        %1614 = vmatprep.subr.bf16.mxu0 0
        %1615 = vmatpush1.bf16.msra.mxu0 0
        %1616 = vmatprep.subr.bf16.mxu0 0
        %1617 = vmatpush1.bf16.msra.mxu0 0
        %1618 = vmatprep.subr.bf16.mxu0 0
        %1619 = vmatpush1.bf16.msra.mxu0 0
        %1620 = vmatprep.subr.bf16.mxu0 0
        %1621 = vmatpush1.bf16.msra.mxu0 0
        %1622 = vmatprep.subr.bf16.mxu0 0
        %1623 = vmatpush1.bf16.msra.mxu0 0
        %1624 = vmatprep.subr.bf16.mxu0 0
        %1625 = vmatpush1.bf16.msra.mxu0 0
        %1626 = vmatprep.mubr.bf16.mxu0 0
        %1627 = vmatmul.mubr.bf16.gmra.mrb[0].mxu0 %v1592
        %v1628 = vpop.f32.mrb[0].mxu0
        %v1629 = vadd.f32 0.0, %v1628
        %v1630 = vpop.f32.mrb[0].mxu0
        %v1631 = vpop.f32.mrb[0].mxu0
        %v1632 = vpop.f32.mrb[0].mxu0
        %1633 = vdwg.mxu0
        %v1634 = vsel %vm558, %v1580, 0.0
        %v1635 = vsel %vm558, %v1629, 0.0
        %v1636 = vadd.f32 %v1634, %v1635
        %s1637 = scalar_lea.vmem %s8, 1
        %v1638 = vld [vmem:[%s1637] sm:$0x1]
        %v1640 = vlaneseq
        %v1641 = vshrl.u32 %v1640, 7
        %v1642 = vsub.s32 0, %v1641
        %v1643 = vrot.slane %v1638, %v1642
        %v1645 = vadd.f32 %v1636, %v1643
        %v1646 = vadd.f32 %v1239, %v1645
        %s1647 = scalar_lea.vmem %s9, 1
        %v1648 = vld [vmem:[%s1647] sm:$0x1]
        %s1649 = scalar_lea.vmem %s10, 1
        %v1650 = vld [vmem:[%s1649] sm:$0x1]
        %v1651 = vsel %vm558, %v1646, 0.0
        %1652 = vadd.xlane.f32.xlu0 %v1651
        %v1653 = vpop.xlane.xlu0 %1652
        %v1654 = vmul.f32 %v1653, %v562
        %v1655 = vsub.f32 %v1646, %v1654
        %v1656 = vmul.f32 %v1655, %v1655
        %v1657 = vsel %vm558, %v1656, 0.0
        %1658 = vadd.xlane.f32.xlu0 %v1657
        %v1659 = vpop.xlane.xlu0 %1658
        %v1660 = vmul.f32 %v1659, %v562
        %v1661 = vadd.f32 %v1660, 1e-12
        %v1662 = vrsqrt.pop %v1661
        %v1663 = vmul.f32 %v1655, %v1662
        %v1665 = vlaneseq
        %v1666 = vshrl.u32 %v1665, 7
        %v1667 = vsub.s32 0, %v1666
        %v1668 = vrot.slane %v1648, %v1667
        %v1670 = vmul.f32 %v1663, %v1668
        %v1672 = vlaneseq
        %v1673 = vshrl.u32 %v1672, 7
        %v1674 = vsub.s32 0, %v1673
        %v1675 = vrot.slane %v1650, %v1674
        %v1677 = vadd.f32 %v1670, %v1675
        %v1678 = vpack.c.bf16 %v1677, %v1677
        %s1679 = scalar_lea.vmem %s11, 16
        %v1680 = vld [vmem:[%s1679] sm:$0xf]
        %v1681 = vld [vmem:[%s1679 + $0x4] sm:$0xf]
        %v1682 = vld [vmem:[%s1679 + $0x8] sm:$0xf]
        %v1683 = vld [vmem:[%s1679 + $0xc] sm:$0xf]
        %s1684 = scalar_lea.vmem %s12, 1
        %v1685 = vld [vmem:[%s1684] sm:$0x1]
        %v1687 = vlaneseq
        %v1688 = vshrl.u32 %v1687, 7
        %v1689 = vsub.s32 0, %v1688
        %v1690 = vrot.slane %v1685, %v1689
        %v1696 = vunpack.c.l.b16 %v1680
        %v1697 = vunpack.c.l.b16 %v1681
        %v1698 = vunpack.c.l.b16 %v1682
        %v1699 = vunpack.c.l.b16 %v1683
        %v1700 = vpack.c.b16 %v1697, %v1696
        %v1701 = vpack.c.b16 %v1699, %v1698
        %v1705 = vsel %vm558, %v1678, 0
        %1707 = vmatprep.subr.bf16.mxu0 0
        %1708 = vmatpush1.bf16.msra.mxu0 %v1700
        %1709 = vmatprep.subr.bf16.mxu0 0
        %1710 = vmatpush1.bf16.msra.mxu0 %v1701
        %1711 = vmatprep.subr.bf16.mxu0 0
        %1712 = vmatpush1.bf16.msra.mxu0 0
        %1713 = vmatprep.subr.bf16.mxu0 0
        %1714 = vmatpush1.bf16.msra.mxu0 0
        %1715 = vmatprep.subr.bf16.mxu0 0
        %1716 = vmatpush1.bf16.msra.mxu0 0
        %1717 = vmatprep.subr.bf16.mxu0 0
        %1718 = vmatpush1.bf16.msra.mxu0 0
        %1719 = vmatprep.subr.bf16.mxu0 0
        %1720 = vmatpush1.bf16.msra.mxu0 0
        %1721 = vmatprep.subr.bf16.mxu0 0
        %1722 = vmatpush1.bf16.msra.mxu0 0
        %1723 = vmatprep.subr.bf16.mxu0 0
        %1724 = vmatpush1.bf16.msra.mxu0 0
        %1725 = vmatprep.subr.bf16.mxu0 0
        %1726 = vmatpush1.bf16.msra.mxu0 0
        %1727 = vmatprep.subr.bf16.mxu0 0
        %1728 = vmatpush1.bf16.msra.mxu0 0
        %1729 = vmatprep.subr.bf16.mxu0 0
        %1730 = vmatpush1.bf16.msra.mxu0 0
        %1731 = vmatprep.subr.bf16.mxu0 0
        %1732 = vmatpush1.bf16.msra.mxu0 0
        %1733 = vmatprep.subr.bf16.mxu0 0
        %1734 = vmatpush1.bf16.msra.mxu0 0
        %1735 = vmatprep.subr.bf16.mxu0 0
        %1736 = vmatpush1.bf16.msra.mxu0 0
        %1737 = vmatprep.subr.bf16.mxu0 0
        %1738 = vmatpush1.bf16.msra.mxu0 0
        %1739 = vmatprep.mubr.bf16.mxu0 0
        %1740 = vmatmul.mubr.bf16.gmra.mrb[0].mxu0 %v1705
        %v1741 = vpop.f32.mrb[0].mxu0
        %v1742 = vadd.f32 %v1690, %v1741
        %v1743 = vpop.f32.mrb[0].mxu0
        %v1744 = vpop.f32.mrb[0].mxu0
        %v1745 = vpop.f32.mrb[0].mxu0
        %1746 = vdwg.mxu0
        %v1747 = vmul.f32 %v1742, %v1742
        %v1748 = vmul.f32 %v1742, %v1747
        %v1749 = vmul.f32 %v1748, 0.044715
        %v1750 = vadd.f32 %v1742, %v1749
        %v1751 = vmul.f32 %v1750, 0.7978846
        %v1752 = vtanh.pop %v1751
        %v1753 = vadd.f32 %v1752, 1.0
        %v1754 = vmul.f32 %v1753, 0.5
        %v1755 = vmul.f32 %v1742, %v1754
        %v1756 = vpack.c.bf16 %v1755, %v1755
        %s1757 = scalar_lea.vmem %s13, 64
        %v1758 = vld [vmem:[%s1757] sm:$0xf]
        %v1759 = vld [vmem:[%s1757 + $0x4] sm:$0xf]
        %v1760 = vld [vmem:[%s1757 + $0x8] sm:$0xf]
        %v1761 = vld [vmem:[%s1757 + $0xc] sm:$0xf]
        %v1762 = vld [vmem:[%s1757 + $0x10] sm:$0xf]
        %v1763 = vld [vmem:[%s1757 + $0x14] sm:$0xf]
        %v1764 = vld [vmem:[%s1757 + $0x18] sm:$0xf]
        %v1765 = vld [vmem:[%s1757 + $0x1c] sm:$0xf]
        %v1766 = vld [vmem:[%s1757 + $0x20] sm:$0xf]
        %v1767 = vld [vmem:[%s1757 + $0x24] sm:$0xf]
        %v1768 = vld [vmem:[%s1757 + $0x28] sm:$0xf]
        %v1769 = vld [vmem:[%s1757 + $0x2c] sm:$0xf]
        %v1770 = vld [vmem:[%s1757 + $0x30] sm:$0xf]
        %v1771 = vld [vmem:[%s1757 + $0x34] sm:$0xf]
        %v1772 = vld [vmem:[%s1757 + $0x38] sm:$0xf]
        %v1773 = vld [vmem:[%s1757 + $0x3c] sm:$0xf]
        %s1774 = scalar_lea.vmem %s14, 1
        %v1775 = vld [vmem:[%s1774] sm:$0x1]
        %v1777 = vlaneseq
        %v1778 = vshrl.u32 %v1777, 7
        %v1779 = vsub.s32 0, %v1778
        %v1780 = vrot.slane %v1775, %v1779
        %v1798 = vunpack.c.l.b16 %v1758
        %v1799 = vunpack.c.l.b16 %v1759
        %v1800 = vunpack.c.l.b16 %v1760
        %v1801 = vunpack.c.l.b16 %v1761
        %v1802 = vunpack.c.l.b16 %v1762
        %v1803 = vunpack.c.l.b16 %v1763
        %v1804 = vunpack.c.l.b16 %v1764
        %v1805 = vunpack.c.l.b16 %v1765
        %v1806 = vunpack.c.l.b16 %v1766
        %v1807 = vunpack.c.l.b16 %v1767
        %v1808 = vunpack.c.l.b16 %v1768
        %v1809 = vunpack.c.l.b16 %v1769
        %v1810 = vunpack.c.l.b16 %v1770
        %v1811 = vunpack.c.l.b16 %v1771
        %v1812 = vunpack.c.l.b16 %v1772
        %v1813 = vunpack.c.l.b16 %v1773
        %v1814 = vpack.c.b16 %v1799, %v1798
        %v1815 = vpack.c.b16 %v1801, %v1800
        %v1816 = vpack.c.b16 %v1803, %v1802
        %v1817 = vpack.c.b16 %v1805, %v1804
        %v1818 = vpack.c.b16 %v1807, %v1806
        %v1819 = vpack.c.b16 %v1809, %v1808
        %v1820 = vpack.c.b16 %v1811, %v1810
        %v1821 = vpack.c.b16 %v1813, %v1812
        %1830 = vmatprep.subr.bf16.mxu0 0
        %1831 = vmatpush1.bf16.msra.mxu0 %v1814
        %1832 = vmatprep.subr.bf16.mxu0 0
        %1833 = vmatpush1.bf16.msra.mxu0 %v1815
        %1834 = vmatprep.subr.bf16.mxu0 0
        %1835 = vmatpush1.bf16.msra.mxu0 %v1816
        %1836 = vmatprep.subr.bf16.mxu0 0
        %1837 = vmatpush1.bf16.msra.mxu0 %v1817
        %1838 = vmatprep.subr.bf16.mxu0 0
        %1839 = vmatpush1.bf16.msra.mxu0 %v1818
        %1840 = vmatprep.subr.bf16.mxu0 0
        %1841 = vmatpush1.bf16.msra.mxu0 %v1819
        %1842 = vmatprep.subr.bf16.mxu0 0
        %1843 = vmatpush1.bf16.msra.mxu0 %v1820
        %1844 = vmatprep.subr.bf16.mxu0 0
        %1845 = vmatpush1.bf16.msra.mxu0 %v1821
        %1846 = vmatprep.subr.bf16.mxu0 0
        %1847 = vmatpush1.bf16.msra.mxu0 0
        %1848 = vmatprep.subr.bf16.mxu0 0
        %1849 = vmatpush1.bf16.msra.mxu0 0
        %1850 = vmatprep.subr.bf16.mxu0 0
        %1851 = vmatpush1.bf16.msra.mxu0 0
        %1852 = vmatprep.subr.bf16.mxu0 0
        %1853 = vmatpush1.bf16.msra.mxu0 0
        %1854 = vmatprep.subr.bf16.mxu0 0
        %1855 = vmatpush1.bf16.msra.mxu0 0
        %1856 = vmatprep.subr.bf16.mxu0 0
        %1857 = vmatpush1.bf16.msra.mxu0 0
        %1858 = vmatprep.subr.bf16.mxu0 0
        %1859 = vmatpush1.bf16.msra.mxu0 0
        %1860 = vmatprep.subr.bf16.mxu0 0
        %1861 = vmatpush1.bf16.msra.mxu0 0
        %1862 = vmatprep.mubr.bf16.mxu0 0
        %1863 = vmatmul.mubr.bf16.gmra.mrb[0].mxu0 %v1756
        %v1864 = vpop.f32.mrb[0].mxu0
        %v1865 = vadd.f32 %v1780, %v1864
        %v1866 = vpop.f32.mrb[0].mxu0
        %v1867 = vpop.f32.mrb[0].mxu0
        %v1868 = vpop.f32.mrb[0].mxu0
        %1869 = vdwg.mxu0
        %v1870 = vadd.f32 %v1677, %v1865
        %s1871 = scalar_lea.vmem %s15, 1
        %v1872 = vld [vmem:[%s1871] sm:$0x1]
        %s1873 = scalar_lea.vmem %s16, 1
        %v1874 = vld [vmem:[%s1873] sm:$0x1]
        %v1875 = vsel %vm558, %v1870, 0.0
        %1876 = vadd.xlane.f32.xlu0 %v1875
        %v1877 = vpop.xlane.xlu0 %1876
        %v1878 = vmul.f32 %v1877, %v562
        %v1879 = vsub.f32 %v1870, %v1878
        %v1880 = vmul.f32 %v1879, %v1879
        %v1881 = vsel %vm558, %v1880, 0.0
        %1882 = vadd.xlane.f32.xlu0 %v1881
        %v1883 = vpop.xlane.xlu0 %1882
        %v1884 = vmul.f32 %v1883, %v562
        %v1885 = vadd.f32 %v1884, 1e-12
        %v1886 = vrsqrt.pop %v1885
        %v1887 = vmul.f32 %v1879, %v1886
        %v1889 = vlaneseq
        %v1890 = vshrl.u32 %v1889, 7
        %v1891 = vsub.s32 0, %v1890
        %v1892 = vrot.slane %v1872, %v1891
        %v1894 = vmul.f32 %v1887, %v1892
        %v1896 = vlaneseq
        %v1897 = vshrl.u32 %v1896, 7
        %v1898 = vsub.s32 0, %v1897
        %v1899 = vrot.slane %v1874, %v1898
        %v1901 = vadd.f32 %v1894, %v1899
        %1902 = vst.msk [vmem:[%s539] sm:$0xff] %vm558, %v1901
        %s1903 = sand.u32 %s401, 1
        %s1904 = scalar_lea.sflag [#allocation3], %s1903
        %s1905 = sand.u32 %s401, 1
        %s1906 = smul.addr %s1905, 8
        %s1907 = scalar_lea.vmem [#allocation2], %s1906
        // Predicated region
        $region89: #{tpu_custom_call.1} parent=87 // pred_check
          %p1908 = pneg %p411
        $region90: #{tpu_custom_call.1} parent=87 // pred_check_branch
          %1910 = sbr.rel (%p1908) target = $region92
        $region91: #{tpu_custom_call.1} parent=87 // pred_region
          %s1912 = ssub.s32 128, 128
          %1913 = vsyncadd %s1904, %s1912
          %s1914 = smul.addr %s31, 128
          %s1915 = scalar_lea.hbm %s17, %s1914
          %s1917 = sshll.u32 %s1907, 4
          %s1918 = int_to_ptr.vmem [resolvable:$true] %s1917
          %1920 = dma.vmem_to_hbm [thread:$0]  %s1918, 128, %s1915, %s1904
        $region92: #{tpu_custom_call.1} parent=87 // pred_fallthru
          _
      $region88: #{tpu_custom_call.1} parent=5 // pred_fallthru
        _
      %p1921 = scmp.le.s32.totalorder 2, %s26
      // Predicated region
      $region93: #{tpu_custom_call.1} parent=5 // pred_check
        %p1922 = pneg %p1921
      $region94: #{tpu_custom_call.1} parent=5 // pred_check_branch
        %1924 = sbr.rel (%p1922) target = $region96
      $region95: #{tpu_custom_call.1} parent=5 // pred_region
        %s1925 = ssub.s32 %s26, 2
        // Predicated region
        $region97: #{tpu_custom_call.1} parent=95 // pred_check
          %p1926 = pneg %p417
        $region98: #{tpu_custom_call.1} parent=95 // pred_check_branch
          %1928 = sbr.rel (%p1926) target = $region100
        $region99: #{tpu_custom_call.1} parent=95 // pred_region
          %s1929 = sand.u32 %s402, 1
          %s1930 = scalar_lea.sflag [#allocation3], %s1929
          %s1931 = sand.u32 %s402, 1
          %s1932 = smul.addr %s1931, 8
          %s1933 = scalar_lea.vmem [#allocation2], %s1932
          %1934 = dma.done %s1930, 128
        $region100: #{tpu_custom_call.1} parent=95 // pred_fallthru
          _
      $region96: #{tpu_custom_call.1} parent=5 // pred_fallthru
        _
    $region6: #{tpu_custom_call.1} parent=1 // loop_footer
      %s30 = sadd.s32 1, %s26
    $region7: #{tpu_custom_call.1} parent=1 // loop_footer_branch
      %25 = sbr.rel target = $region3
    $region8: #{tpu_custom_call.1} parent=1 // loop_exit
      _
    %1935 = vsyncpa [#allocation3], 1
    %s1936 = scalar_lea.sflag [#allocation3], 1
    %1937 = vsyncpa %s1936, 1

</llo_original>
